<compile_context>
chip_gen: v7x
topology: tpu7x:2x2x1
jax: 0.10.0
libtpu: 0.0.40
codegen_flags: <defaults>
</compile_context>

<pallas_src>
import functools

import jax
import jax.numpy as jnp
import numpy as np
from jax.experimental import pallas as pl
from jax.experimental.pallas import tpu as pltpu

# ----------------------------- hyper-params (small, synthetic) ---------------
VOCAB = 50
EMB_DIM = 32                 # params.emb_dim
FILTERS = 16                 # params.filters
WS1, WS2, WS3 = 3, 4, 5      # params.window_size{1,2,3}
PAD1, PAD2, PAD3 = 0, 1, 2
KMAX = WS3                   # widest conv window
NTAGS = 8
B, L = 2, 16
DROPOUT_P = 0.5              # inference mode -> identity


# ----------------------------- Pallas kernel ---------------------------------
def classify_kernel(sents_ref, emb_ref, w_ref, bconv_ref, wp_ref, bp_ref,
                    out_ref, x_pad, *, nf, kmax, pad3, seq_len, valid_lens):
    """Fused: embedding gather -> pad -> 3x Conv1d -> length max -> ReLU -> Linear.

    sents_ref : (B*L, 1) int32 token ids (VMEM)
    emb_ref   : (VOCAB, E) embedding table, resident in VMEM
    w_ref     : (KMAX, E, 3F) fused conv weight (column blocks = conv1|conv2|conv3)
    bconv_ref : (1, 3*F) concatenated conv biases
    wp_ref    : (F, NTAGS) projection weight (pre-transposed), bp_ref : (1, NTAGS)
    out_ref   : (B, NTAGS)
    x_pad     : (B, L + 2*PAD3, E) VMEM scratch = shared zero-padded activation
    """
    bsz = out_ref.shape[0]
    lp = x_pad.shape[1]
    lout = lp - kmax + 1
    vocab = emb_ref.shape[0]

    # ---- embedding gather fused in-kernel: one-hot x table on the MXU --------
    tok = sents_ref[...]                                            # (B*L, 1) i32
    lane = jax.lax.broadcasted_iota(jnp.int32, (bsz * seq_len, vocab), 1)
    one_hot = (lane == tok).astype(jnp.float32)                     # (B*L, VOCAB)
    emb2d = jnp.dot(one_hot, emb_ref[...],
                    preferred_element_type=jnp.float32)             # (B*L, E)

    # ---- build the single shared padded activation in VMEM scratch -----------
    x_pad[...] = jnp.zeros_like(x_pad)
    for b in range(bsz):                                            # static unroll
        x_pad[b, pad3:pad3 + seq_len, :] = emb2d[b * seq_len:(b + 1) * seq_len, :]

    # ---- KMAX accumulated shifted matmuls (no im2col lane-relayout) ----------
    h_rows = []
    for b in range(bsz):                                            # static unroll
        acc = jnp.dot(x_pad[b, 0:lout, :], w_ref[0],
                      preferred_element_type=jnp.float32)           # (Lout, 3F)
        for k in range(1, kmax):
            acc = acc + jnp.dot(x_pad[b, k:k + lout, :], w_ref[k],
                                preferred_element_type=jnp.float32)

        # Per-conv sliced maxima over their STATIC valid lengths (no -1e30 mask).
        m1 = jnp.max(acc[:valid_lens[0], 0:nf], axis=0, keepdims=True)
        m2 = jnp.max(acc[:valid_lens[1], nf:2 * nf], axis=0, keepdims=True)
        m3 = jnp.max(acc[:valid_lens[2], 2 * nf:3 * nf], axis=0, keepdims=True)

        # Bias is constant over length -> add after the max (equivalent, cheaper),
        # then max over concat(length) == elementwise max of per-conv maxima.
        hb = jnp.maximum(jnp.maximum(m1 + bconv_ref[:, 0:nf],
                                     m2 + bconv_ref[:, nf:2 * nf]),
                         m3 + bconv_ref[:, 2 * nf:3 * nf])
        h_rows.append(jnp.maximum(hb, 0.0))                         # ReLU; dropout = id

    h = jnp.concatenate(h_rows, axis=0)                             # (B, F)

    # Tiny projection; a single MXU push (no extra round-trips).
    out_ref[...] = (jnp.dot(h, wp_ref[...], preferred_element_type=jnp.float32)
                    + bp_ref[...])


# ----------------------------- one-time parameter packing --------------------
def pack_params(params):
    """Done ONCE (outside the hot path): transpose + fuse conv weights/biases."""
    emb_w, (w1, b1), (w2, b2), (w3, b3), (wp, bp) = params
    e = emb_w.shape[1]
    nf = w1.shape[0]

    def place(w, offset):
        # w: (F, E, K) -> (KMAX, E, F) slab with taps at [offset, offset+K)
        k = w.shape[2]
        wt = jnp.transpose(w, (2, 1, 0))                            # (K, E, F)
        return jnp.zeros((KMAX, e, nf), w.dtype).at[offset:offset + k].set(wt)

    # conv_i reads x_pad[t + (PAD3 - pad_i) + k]  ->  tap block starts at PAD3 - pad_i
    w_fused = jnp.concatenate([place(w1, PAD3 - PAD1),
                               place(w2, PAD3 - PAD2),
                               place(w3, PAD3 - PAD3)], axis=2)     # (KMAX, E, 3F)
    b_fused = jnp.concatenate([b1, b2, b3]).reshape(1, 3 * nf)
    return emb_w, w_fused, b_fused, wp.T, bp.reshape(1, -1)


# ----------------------------- forward wrapper --------------------------------
def classify_forward(input_sents, input_lens, packed):
    """input_sents: (B, L) int32 token ids; input_lens unused (matches PyTorch)."""
    del input_lens  # not used by the reference forward pass
    emb_w, w_fused, b_fused, wp_t, bp_r = packed

    bsz, lseq = input_sents.shape
    lp = lseq + 2 * PAD3
    valid_lens = (lseq + 2 * PAD1 - WS1 + 1,
                  lseq + 2 * PAD2 - WS2 + 1,
                  lseq + 2 * PAD3 - WS3 + 1)

    kernel = functools.partial(classify_kernel, nf=FILTERS, kmax=KMAX, pad3=PAD3,
                               seq_len=lseq, valid_lens=valid_lens)

    # Token ids enter as a tiny int32 column so the kernel's one-hot compare is
    # lane-broadcast only (no in-kernel relayout).
    sents_col = input_sents.reshape(bsz * lseq, 1).astype(jnp.int32)

    vmem = pl.BlockSpec(memory_space=pltpu.MemorySpace.VMEM)
    return pl.pallas_call(
        kernel,
        out_shape=jax.ShapeDtypeStruct((bsz, NTAGS), jnp.float32),
        in_specs=[vmem] * 6,
        out_specs=vmem,
        scratch_shapes=[pltpu.VMEM((bsz, lp, EMB_DIM), jnp.float32)],
    )(sents_col, emb_w, w_fused, b_fused, wp_t, bp_r)


# ----------------------------- pure-JAX reference (for checking) -------------
def classify_reference(input_sents, params):
    emb_w, (w1, b1), (w2, b2), (w3, b3), (wp, bp) = params
    embeds = jnp.take(emb_w, input_sents, axis=0)                   # (B, L, E)
    x = jnp.transpose(embeds, (0, 2, 1))                            # (B, E, L)  NCW

    def conv1d(x, w, b, pad):
        y = jax.lax.conv_general_dilated(
            x, w, window_strides=(1,), padding=[(pad, pad)],
            dimension_numbers=('NCH', 'OIH', 'NCH'))
        return y + b[None, :, None]

    h1 = conv1d(x, w1, b1, PAD1)
    h2 = conv1d(x, w2, b2, PAD2)
    h3 = conv1d(x, w3, b3, PAD3)
    h = jnp.concatenate((h1, h2, h3), axis=2).max(axis=2)           # (B, F)
    h = jax.nn.relu(h)                                              # dropout = identity
    return h @ wp.T + bp


# ----------------------------- deterministic param init ----------------------
def init_params(key):
    ks = jax.random.split(key, 9)
    emb_w = jax.random.normal(ks[0], (VOCAB, EMB_DIM), jnp.float32) * 0.1
    w1 = jax.random.normal(ks[1], (FILTERS, EMB_DIM, WS1), jnp.float32) * 0.05
    b1 = jax.random.normal(ks[2], (FILTERS,), jnp.float32) * 0.05
    w2 = jax.random.normal(ks[3], (FILTERS, EMB_DIM, WS2), jnp.float32) * 0.05
    b2 = jax.random.normal(ks[4], (FILTERS,), jnp.float32) * 0.05
    w3 = jax.random.normal(ks[5], (FILTERS, EMB_DIM, WS3), jnp.float32) * 0.05
    b3 = jax.random.normal(ks[6], (FILTERS,), jnp.float32) * 0.05
    limit = float(np.sqrt(6.0 / (FILTERS + NTAGS)))                 # xavier_uniform
    wp = jax.random.uniform(ks[7], (NTAGS, FILTERS), jnp.float32, -limit, limit)
    bp = jax.random.normal(ks[8], (NTAGS,), jnp.float32) * 0.05
    return emb_w, (w1, b1), (w2, b2), (w3, b3), (wp, bp)


if __name__ == "__main__":
    root = jax.random.PRNGKey(0)
    k_params, k_tok, k_len = jax.random.split(root, 3)

    params = init_params(k_params)
    packed = pack_params(params)          # one-time packing (outside hot path)

    input_sents = jax.random.randint(k_tok, (B, L), 0, VOCAB, dtype=jnp.int32)
    input_lens = jax.random.randint(k_len, (B,), 1, L + 1, dtype=jnp.int32)

    out = classify_forward(input_sents, input_lens, packed)
    out = jax.block_until_ready(out)

    ref = classify_reference(input_sents, params)
    np.testing.assert_allclose(np.asarray(out), np.asarray(ref),
                               rtol=1e-4, atol=1e-4)
    print("KERNEL_OK")
</pallas_src>

<mosaic_0001>
module attributes {stable_mosaic.version = 11 : i64} {
  func.func @classify_kernel(%arg0: memref<32x1xi32, #tpu.memory_space<vmem>>, %arg1: memref<50x32xf32, #tpu.memory_space<vmem>>, %arg2: memref<5x32x48xf32, #tpu.memory_space<vmem>>, %arg3: memref<1x48xf32, #tpu.memory_space<vmem>>, %arg4: memref<16x8xf32, #tpu.memory_space<vmem>>, %arg5: memref<1x8xf32, #tpu.memory_space<vmem>>, %arg6: memref<2x8xf32, #tpu.memory_space<vmem>>, %arg7: memref<2x20x32xf32, #tpu.memory_space<vmem>>) attributes {dimension_semantics = [], scalar_prefetch = 0 : i64, scratch_operands = 1 : i64, tpu.core_type = #tpu.core_type<tc>} {
    %c0 = arith.constant 0 : index
    %c0_0 = arith.constant 0 : index
    %0 = vector.load %arg0[%c0, %c0_0] : memref<32x1xi32, #tpu.memory_space<vmem>>, vector<32x1xi32>
    %1 = tpu.iota {dimensions = array<i32: 1>} : vector<32x50xi32>
    %2 = vector.broadcast %0 : vector<32x1xi32> to vector<32x50xi32>
    %3 = arith.cmpi eq, %1, %2 : vector<32x50xi32>
    %4 = arith.extui %3 : vector<32x50xi1> to vector<32x50xi32>
    %5 = arith.sitofp %4 : vector<32x50xi32> to vector<32x50xf32>
    %c0_1 = arith.constant 0 : index
    %c0_2 = arith.constant 0 : index
    %6 = vector.load %arg1[%c0_1, %c0_2] : memref<50x32xf32, #tpu.memory_space<vmem>>, vector<50x32xf32>
    %cst = arith.constant dense<0.000000e+00> : vector<32x32xf32>
    %7 = tpu.matmul %5, %6, %cst {dimension_numbers = #tpu.dot_dimension_numbers<[1], [0], [0], [1], [0, 0, 1, 1], [], []>} : vector<32x50xf32>, vector<50x32xf32>, vector<32x32xf32> -> vector<32x32xf32>
    %cst_3 = arith.constant 0.000000e+00 : f32
    %8 = vector.broadcast %cst_3 : f32 to vector<2x20x32xf32>
    %c0_4 = arith.constant 0 : index
    %c0_5 = arith.constant 0 : index
    %c0_6 = arith.constant 0 : index
    %9 = vector.load %arg7[%c0_4, %c0_5, %c0_6] : memref<2x20x32xf32, #tpu.memory_space<vmem>>, vector<2x20x32xf32>
    tpu.vector_store %arg7[%c0_4, %c0_5, %c0_6], %8 {strides = array<i32>} : memref<2x20x32xf32, #tpu.memory_space<vmem>>, vector<2x20x32xf32>,
    %10 = vector.extract_strided_slice %7 {offsets = [0, 0], sizes = [16, 32], strides = [1, 1]} : vector<32x32xf32> to vector<16x32xf32>
    %c0_7 = arith.constant 0 : index
    %c2 = arith.constant 2 : index
    %c0_8 = arith.constant 0 : index
    %11 = vector.load %arg7[%c0_7, %c2, %c0_8] : memref<2x20x32xf32, #tpu.memory_space<vmem>>, vector<1x16x32xf32>
    %12 = vector.shape_cast %11 : vector<1x16x32xf32> to vector<16x32xf32>
    %13 = vector.shape_cast %10 : vector<16x32xf32> to vector<1x16x32xf32>
    tpu.vector_store %arg7[%c0_7, %c2, %c0_8], %13 {strides = array<i32>} : memref<2x20x32xf32, #tpu.memory_space<vmem>>, vector<1x16x32xf32>,
    %14 = vector.extract_strided_slice %7 {offsets = [16, 0], sizes = [16, 32], strides = [1, 1]} : vector<32x32xf32> to vector<16x32xf32>
    %c1 = arith.constant 1 : index
    %c2_9 = arith.constant 2 : index
    %c0_10 = arith.constant 0 : index
    %15 = vector.load %arg7[%c1, %c2_9, %c0_10] : memref<2x20x32xf32, #tpu.memory_space<vmem>>, vector<1x16x32xf32>
    %16 = vector.shape_cast %15 : vector<1x16x32xf32> to vector<16x32xf32>
    %17 = vector.shape_cast %14 : vector<16x32xf32> to vector<1x16x32xf32>
    tpu.vector_store %arg7[%c1, %c2_9, %c0_10], %17 {strides = array<i32>} : memref<2x20x32xf32, #tpu.memory_space<vmem>>, vector<1x16x32xf32>,
    %c0_11 = arith.constant 0 : index
    %c0_12 = arith.constant 0 : index
    %c0_13 = arith.constant 0 : index
    %18 = vector.load %arg7[%c0_11, %c0_12, %c0_13] : memref<2x20x32xf32, #tpu.memory_space<vmem>>, vector<1x16x32xf32>
    %19 = vector.shape_cast %18 : vector<1x16x32xf32> to vector<16x32xf32>
    %c0_14 = arith.constant 0 : index
    %c0_15 = arith.constant 0 : index
    %c0_16 = arith.constant 0 : index
    %20 = vector.load %arg2[%c0_14, %c0_15, %c0_16] : memref<5x32x48xf32, #tpu.memory_space<vmem>>, vector<1x32x48xf32>
    %21 = vector.shape_cast %20 : vector<1x32x48xf32> to vector<32x48xf32>
    %cst_17 = arith.constant dense<0.000000e+00> : vector<16x48xf32>
    %22 = tpu.matmul %19, %21, %cst_17 {dimension_numbers = #tpu.dot_dimension_numbers<[1], [0], [0], [1], [0, 0, 1, 1], [], []>} : vector<16x32xf32>, vector<32x48xf32>, vector<16x48xf32> -> vector<16x48xf32>
    %c0_18 = arith.constant 0 : index
    %c1_19 = arith.constant 1 : index
    %c0_20 = arith.constant 0 : index
    %23 = vector.load %arg7[%c0_18, %c1_19, %c0_20] : memref<2x20x32xf32, #tpu.memory_space<vmem>>, vector<1x16x32xf32>
    %24 = vector.shape_cast %23 : vector<1x16x32xf32> to vector<16x32xf32>
    %c1_21 = arith.constant 1 : index
    %c0_22 = arith.constant 0 : index
    %c0_23 = arith.constant 0 : index
    %25 = vector.load %arg2[%c1_21, %c0_22, %c0_23] : memref<5x32x48xf32, #tpu.memory_space<vmem>>, vector<1x32x48xf32>
    %26 = vector.shape_cast %25 : vector<1x32x48xf32> to vector<32x48xf32>
    %cst_24 = arith.constant dense<0.000000e+00> : vector<16x48xf32>
    %27 = tpu.matmul %24, %26, %cst_24 {dimension_numbers = #tpu.dot_dimension_numbers<[1], [0], [0], [1], [0, 0, 1, 1], [], []>} : vector<16x32xf32>, vector<32x48xf32>, vector<16x48xf32> -> vector<16x48xf32>
    %28 = arith.addf %22, %27 : vector<16x48xf32>
    %c0_25 = arith.constant 0 : index
    %c2_26 = arith.constant 2 : index
    %c0_27 = arith.constant 0 : index
    %29 = vector.load %arg7[%c0_25, %c2_26, %c0_27] : memref<2x20x32xf32, #tpu.memory_space<vmem>>, vector<1x16x32xf32>
    %30 = vector.shape_cast %29 : vector<1x16x32xf32> to vector<16x32xf32>
    %c2_28 = arith.constant 2 : index
    %c0_29 = arith.constant 0 : index
    %c0_30 = arith.constant 0 : index
    %31 = vector.load %arg2[%c2_28, %c0_29, %c0_30] : memref<5x32x48xf32, #tpu.memory_space<vmem>>, vector<1x32x48xf32>
    %32 = vector.shape_cast %31 : vector<1x32x48xf32> to vector<32x48xf32>
    %cst_31 = arith.constant dense<0.000000e+00> : vector<16x48xf32>
    %33 = tpu.matmul %30, %32, %cst_31 {dimension_numbers = #tpu.dot_dimension_numbers<[1], [0], [0], [1], [0, 0, 1, 1], [], []>} : vector<16x32xf32>, vector<32x48xf32>, vector<16x48xf32> -> vector<16x48xf32>
    %34 = arith.addf %28, %33 : vector<16x48xf32>
    %c0_32 = arith.constant 0 : index
    %c3 = arith.constant 3 : index
    %c0_33 = arith.constant 0 : index
    %35 = vector.load %arg7[%c0_32, %c3, %c0_33] : memref<2x20x32xf32, #tpu.memory_space<vmem>>, vector<1x16x32xf32>
    %36 = vector.shape_cast %35 : vector<1x16x32xf32> to vector<16x32xf32>
    %c3_34 = arith.constant 3 : index
    %c0_35 = arith.constant 0 : index
    %c0_36 = arith.constant 0 : index
    %37 = vector.load %arg2[%c3_34, %c0_35, %c0_36] : memref<5x32x48xf32, #tpu.memory_space<vmem>>, vector<1x32x48xf32>
    %38 = vector.shape_cast %37 : vector<1x32x48xf32> to vector<32x48xf32>
    %cst_37 = arith.constant dense<0.000000e+00> : vector<16x48xf32>
    %39 = tpu.matmul %36, %38, %cst_37 {dimension_numbers = #tpu.dot_dimension_numbers<[1], [0], [0], [1], [0, 0, 1, 1], [], []>} : vector<16x32xf32>, vector<32x48xf32>, vector<16x48xf32> -> vector<16x48xf32>
    %40 = arith.addf %34, %39 : vector<16x48xf32>
    %c0_38 = arith.constant 0 : index
    %c4 = arith.constant 4 : index
    %c0_39 = arith.constant 0 : index
    %41 = vector.load %arg7[%c0_38, %c4, %c0_39] : memref<2x20x32xf32, #tpu.memory_space<vmem>>, vector<1x16x32xf32>
    %42 = vector.shape_cast %41 : vector<1x16x32xf32> to vector<16x32xf32>
    %c4_40 = arith.constant 4 : index
    %c0_41 = arith.constant 0 : index
    %c0_42 = arith.constant 0 : index
    %43 = vector.load %arg2[%c4_40, %c0_41, %c0_42] : memref<5x32x48xf32, #tpu.memory_space<vmem>>, vector<1x32x48xf32>
    %44 = vector.shape_cast %43 : vector<1x32x48xf32> to vector<32x48xf32>
    %cst_43 = arith.constant dense<0.000000e+00> : vector<16x48xf32>
    %45 = tpu.matmul %42, %44, %cst_43 {dimension_numbers = #tpu.dot_dimension_numbers<[1], [0], [0], [1], [0, 0, 1, 1], [], []>} : vector<16x32xf32>, vector<32x48xf32>, vector<16x48xf32> -> vector<16x48xf32>
    %46 = arith.addf %40, %45 : vector<16x48xf32>
    %47 = vector.extract_strided_slice %46 {offsets = [0, 0], sizes = [14, 16], strides = [1, 1]} : vector<16x48xf32> to vector<14x16xf32>
    %cst_44 = arith.constant dense<0xFF800000> : vector<16xf32>
    %48 = vector.multi_reduction <maximumf>, %47, %cst_44 [0] : vector<14x16xf32> to vector<16xf32>
    %49 = vector.shape_cast %48 : vector<16xf32> to vector<1x16xf32>
    %50 = vector.extract_strided_slice %46 {offsets = [0, 16], sizes = [15, 16], strides = [1, 1]} : vector<16x48xf32> to vector<15x16xf32>
    %cst_45 = arith.constant dense<0xFF800000> : vector<16xf32>
    %51 = vector.multi_reduction <maximumf>, %50, %cst_45 [0] : vector<15x16xf32> to vector<16xf32>
    %52 = vector.shape_cast %51 : vector<16xf32> to vector<1x16xf32>
    %53 = vector.extract_strided_slice %46 {offsets = [0, 32], sizes = [16, 16], strides = [1, 1]} : vector<16x48xf32> to vector<16x16xf32>
    %cst_46 = arith.constant dense<0xFF800000> : vector<16xf32>
    %54 = vector.multi_reduction <maximumf>, %53, %cst_46 [0] : vector<16x16xf32> to vector<16xf32>
    %55 = vector.shape_cast %54 : vector<16xf32> to vector<1x16xf32>
    %c0_47 = arith.constant 0 : index
    %c0_48 = arith.constant 0 : index
    %56 = vector.load %arg3[%c0_47, %c0_48] : memref<1x48xf32, #tpu.memory_space<vmem>>, vector<1x16xf32>
    %57 = arith.addf %49, %56 : vector<1x16xf32>
    %c0_49 = arith.constant 0 : index
    %c16 = arith.constant 16 : index
    %58 = vector.load %arg3[%c0_49, %c16] : memref<1x48xf32, #tpu.memory_space<vmem>>, vector<1x16xf32>
    %59 = arith.addf %52, %58 : vector<1x16xf32>
    %60 = arith.maximumf %57, %59 : vector<1x16xf32>
    %c0_50 = arith.constant 0 : index
    %c32 = arith.constant 32 : index
    %61 = vector.load %arg3[%c0_50, %c32] : memref<1x48xf32, #tpu.memory_space<vmem>>, vector<1x16xf32>
    %62 = arith.addf %55, %61 : vector<1x16xf32>
    %63 = arith.maximumf %60, %62 : vector<1x16xf32>
    %cst_51 = arith.constant 0.000000e+00 : f32
    %64 = vector.broadcast %cst_51 : f32 to vector<1x16xf32>
    %65 = arith.maximumf %63, %64 : vector<1x16xf32>
    %c1_52 = arith.constant 1 : index
    %c0_53 = arith.constant 0 : index
    %c0_54 = arith.constant 0 : index
    %66 = vector.load %arg7[%c1_52, %c0_53, %c0_54] : memref<2x20x32xf32, #tpu.memory_space<vmem>>, vector<1x16x32xf32>
    %67 = vector.shape_cast %66 : vector<1x16x32xf32> to vector<16x32xf32>
    %c0_55 = arith.constant 0 : index
    %c0_56 = arith.constant 0 : index
    %c0_57 = arith.constant 0 : index
    %68 = vector.load %arg2[%c0_55, %c0_56, %c0_57] : memref<5x32x48xf32, #tpu.memory_space<vmem>>, vector<1x32x48xf32>
    %69 = vector.shape_cast %68 : vector<1x32x48xf32> to vector<32x48xf32>
    %cst_58 = arith.constant dense<0.000000e+00> : vector<16x48xf32>
    %70 = tpu.matmul %67, %69, %cst_58 {dimension_numbers = #tpu.dot_dimension_numbers<[1], [0], [0], [1], [0, 0, 1, 1], [], []>} : vector<16x32xf32>, vector<32x48xf32>, vector<16x48xf32> -> vector<16x48xf32>
    %c1_59 = arith.constant 1 : index
    %c1_60 = arith.constant 1 : index
    %c0_61 = arith.constant 0 : index
    %71 = vector.load %arg7[%c1_59, %c1_60, %c0_61] : memref<2x20x32xf32, #tpu.memory_space<vmem>>, vector<1x16x32xf32>
    %72 = vector.shape_cast %71 : vector<1x16x32xf32> to vector<16x32xf32>
    %c1_62 = arith.constant 1 : index
    %c0_63 = arith.constant 0 : index
    %c0_64 = arith.constant 0 : index
    %73 = vector.load %arg2[%c1_62, %c0_63, %c0_64] : memref<5x32x48xf32, #tpu.memory_space<vmem>>, vector<1x32x48xf32>
    %74 = vector.shape_cast %73 : vector<1x32x48xf32> to vector<32x48xf32>
    %cst_65 = arith.constant dense<0.000000e+00> : vector<16x48xf32>
    %75 = tpu.matmul %72, %74, %cst_65 {dimension_numbers = #tpu.dot_dimension_numbers<[1], [0], [0], [1], [0, 0, 1, 1], [], []>} : vector<16x32xf32>, vector<32x48xf32>, vector<16x48xf32> -> vector<16x48xf32>
    %76 = arith.addf %70, %75 : vector<16x48xf32>
    %c1_66 = arith.constant 1 : index
    %c2_67 = arith.constant 2 : index
    %c0_68 = arith.constant 0 : index
    %77 = vector.load %arg7[%c1_66, %c2_67, %c0_68] : memref<2x20x32xf32, #tpu.memory_space<vmem>>, vector<1x16x32xf32>
    %78 = vector.shape_cast %77 : vector<1x16x32xf32> to vector<16x32xf32>
    %c2_69 = arith.constant 2 : index
    %c0_70 = arith.constant 0 : index
    %c0_71 = arith.constant 0 : index
    %79 = vector.load %arg2[%c2_69, %c0_70, %c0_71] : memref<5x32x48xf32, #tpu.memory_space<vmem>>, vector<1x32x48xf32>
    %80 = vector.shape_cast %79 : vector<1x32x48xf32> to vector<32x48xf32>
    %cst_72 = arith.constant dense<0.000000e+00> : vector<16x48xf32>
    %81 = tpu.matmul %78, %80, %cst_72 {dimension_numbers = #tpu.dot_dimension_numbers<[1], [0], [0], [1], [0, 0, 1, 1], [], []>} : vector<16x32xf32>, vector<32x48xf32>, vector<16x48xf32> -> vector<16x48xf32>
    %82 = arith.addf %76, %81 : vector<16x48xf32>
    %c1_73 = arith.constant 1 : index
    %c3_74 = arith.constant 3 : index
    %c0_75 = arith.constant 0 : index
    %83 = vector.load %arg7[%c1_73, %c3_74, %c0_75] : memref<2x20x32xf32, #tpu.memory_space<vmem>>, vector<1x16x32xf32>
    %84 = vector.shape_cast %83 : vector<1x16x32xf32> to vector<16x32xf32>
    %c3_76 = arith.constant 3 : index
    %c0_77 = arith.constant 0 : index
    %c0_78 = arith.constant 0 : index
    %85 = vector.load %arg2[%c3_76, %c0_77, %c0_78] : memref<5x32x48xf32, #tpu.memory_space<vmem>>, vector<1x32x48xf32>
    %86 = vector.shape_cast %85 : vector<1x32x48xf32> to vector<32x48xf32>
    %cst_79 = arith.constant dense<0.000000e+00> : vector<16x48xf32>
    %87 = tpu.matmul %84, %86, %cst_79 {dimension_numbers = #tpu.dot_dimension_numbers<[1], [0], [0], [1], [0, 0, 1, 1], [], []>} : vector<16x32xf32>, vector<32x48xf32>, vector<16x48xf32> -> vector<16x48xf32>
    %88 = arith.addf %82, %87 : vector<16x48xf32>
    %c1_80 = arith.constant 1 : index
    %c4_81 = arith.constant 4 : index
    %c0_82 = arith.constant 0 : index
    %89 = vector.load %arg7[%c1_80, %c4_81, %c0_82] : memref<2x20x32xf32, #tpu.memory_space<vmem>>, vector<1x16x32xf32>
    %90 = vector.shape_cast %89 : vector<1x16x32xf32> to vector<16x32xf32>
    %c4_83 = arith.constant 4 : index
    %c0_84 = arith.constant 0 : index
    %c0_85 = arith.constant 0 : index
    %91 = vector.load %arg2[%c4_83, %c0_84, %c0_85] : memref<5x32x48xf32, #tpu.memory_space<vmem>>, vector<1x32x48xf32>
    %92 = vector.shape_cast %91 : vector<1x32x48xf32> to vector<32x48xf32>
    %cst_86 = arith.constant dense<0.000000e+00> : vector<16x48xf32>
    %93 = tpu.matmul %90, %92, %cst_86 {dimension_numbers = #tpu.dot_dimension_numbers<[1], [0], [0], [1], [0, 0, 1, 1], [], []>} : vector<16x32xf32>, vector<32x48xf32>, vector<16x48xf32> -> vector<16x48xf32>
    %94 = arith.addf %88, %93 : vector<16x48xf32>
    %95 = vector.extract_strided_slice %94 {offsets = [0, 0], sizes = [14, 16], strides = [1, 1]} : vector<16x48xf32> to vector<14x16xf32>
    %cst_87 = arith.constant dense<0xFF800000> : vector<16xf32>
    %96 = vector.multi_reduction <maximumf>, %95, %cst_87 [0] : vector<14x16xf32> to vector<16xf32>
    %97 = vector.shape_cast %96 : vector<16xf32> to vector<1x16xf32>
    %98 = vector.extract_strided_slice %94 {offsets = [0, 16], sizes = [15, 16], strides = [1, 1]} : vector<16x48xf32> to vector<15x16xf32>
    %cst_88 = arith.constant dense<0xFF800000> : vector<16xf32>
    %99 = vector.multi_reduction <maximumf>, %98, %cst_88 [0] : vector<15x16xf32> to vector<16xf32>
    %100 = vector.shape_cast %99 : vector<16xf32> to vector<1x16xf32>
    %101 = vector.extract_strided_slice %94 {offsets = [0, 32], sizes = [16, 16], strides = [1, 1]} : vector<16x48xf32> to vector<16x16xf32>
    %cst_89 = arith.constant dense<0xFF800000> : vector<16xf32>
    %102 = vector.multi_reduction <maximumf>, %101, %cst_89 [0] : vector<16x16xf32> to vector<16xf32>
    %103 = vector.shape_cast %102 : vector<16xf32> to vector<1x16xf32>
    %c0_90 = arith.constant 0 : index
    %c0_91 = arith.constant 0 : index
    %104 = vector.load %arg3[%c0_90, %c0_91] : memref<1x48xf32, #tpu.memory_space<vmem>>, vector<1x16xf32>
    %105 = arith.addf %97, %104 : vector<1x16xf32>
    %c0_92 = arith.constant 0 : index
    %c16_93 = arith.constant 16 : index
    %106 = vector.load %arg3[%c0_92, %c16_93] : memref<1x48xf32, #tpu.memory_space<vmem>>, vector<1x16xf32>
    %107 = arith.addf %100, %106 : vector<1x16xf32>
    %108 = arith.maximumf %105, %107 : vector<1x16xf32>
    %c0_94 = arith.constant 0 : index
    %c32_95 = arith.constant 32 : index
    %109 = vector.load %arg3[%c0_94, %c32_95] : memref<1x48xf32, #tpu.memory_space<vmem>>, vector<1x16xf32>
    %110 = arith.addf %103, %109 : vector<1x16xf32>
    %111 = arith.maximumf %108, %110 : vector<1x16xf32>
    %cst_96 = arith.constant 0.000000e+00 : f32
    %112 = vector.broadcast %cst_96 : f32 to vector<1x16xf32>
    %113 = arith.maximumf %111, %112 : vector<1x16xf32>
    %114 = tpu.concatenate %65, %113 in 0 : vector<1x16xf32>, vector<1x16xf32> -> vector<2x16xf32>
    %c0_97 = arith.constant 0 : index
    %c0_98 = arith.constant 0 : index
    %115 = vector.load %arg4[%c0_97, %c0_98] : memref<16x8xf32, #tpu.memory_space<vmem>>, vector<16x8xf32>
    %cst_99 = arith.constant dense<0.000000e+00> : vector<2x8xf32>
    %116 = tpu.matmul %114, %115, %cst_99 {dimension_numbers = #tpu.dot_dimension_numbers<[1], [0], [0], [1], [0, 0, 1, 1], [], []>} : vector<2x16xf32>, vector<16x8xf32>, vector<2x8xf32> -> vector<2x8xf32>
    %c0_100 = arith.constant 0 : index
    %c0_101 = arith.constant 0 : index
    %117 = vector.load %arg5[%c0_100, %c0_101] : memref<1x8xf32, #tpu.memory_space<vmem>>, vector<1x8xf32>
    %118 = vector.broadcast %117 : vector<1x8xf32> to vector<2x8xf32>
    %119 = arith.addf %116, %118 : vector<2x8xf32>
    %c0_102 = arith.constant 0 : index
    %c0_103 = arith.constant 0 : index
    %120 = vector.load %arg6[%c0_102, %c0_103] : memref<2x8xf32, #tpu.memory_space<vmem>>, vector<2x8xf32>
    tpu.vector_store %arg6[%c0_102, %c0_103], %119 {strides = array<i32>} : memref<2x8xf32, #tpu.memory_space<vmem>>, vector<2x8xf32>,
    return
  }
}

</mosaic_0001>

<llo_original>
// kernel: tpu_custom_call.1
$region0: #{tpu_custom_call.1}
  #allocation0 [shape = 'u32[]', space=smem, size = 0x4, offset = 0x4, fixed_abs, tag = 'smem constant byte address 0x4 - core index']
  #allocation1 [shape = 'u32[144,128]{1,0:T(1,128)}', space=vmem, size = 0x12000, scoped, tag = 'internal scratch']
  #allocation2 [shape = 'f32[2,20,32]{2,1,0:T(8,128)}', space=vmem, size = 0x6000, scoped, tag = 'scratch operand']
  %s0 = inlined_call_operand.vmem [shape: s32[32,1], index: 0, kind: input, shape index: {}]
  %s1 = inlined_call_operand.vmem [shape: f32[50,32], index: 1, kind: input, shape index: {}]
  %s2 = inlined_call_operand.hbm [shape: f32[5,32,48], index: 2, kind: input, shape index: {}]
  %s3 = inlined_call_operand.vmem [shape: f32[1,48], index: 3, kind: input, shape index: {}]
  %s4 = inlined_call_operand.vmem [shape: f32[16,8], index: 4, kind: input, shape index: {}]
  %s5 = inlined_call_operand.vmem [shape: f32[1,8], index: 5, kind: input, shape index: {}]
  %s6 = inlined_call_operand.hbm [shape: f32[2,8], index: 6, kind: output, shape index: {}]
  %s7 = sld [smem:[#allocation0]]
  $region38: #{tpu_custom_call.1} parent=0
    _
  %s9 = ssub.s32 1, %s7
  %s10 = scalar_select 0, %s9, %s7
  $region1: #{tpu_custom_call.1} parent=0
    #allocation3 [shape = 'u8[81920]{0}', space=vmem, size = 0x14000, scoped, tag = 'input window, operand 2, single buffered']
    #allocation4 [shape = 's32[1]{0}', space=sflag, size = 0x4, scoped, tag = 'scoped memory for tpu_custom_call.1']
    #allocation5 [shape = 's32[1]{0}', space=sflag, size = 0x4, scoped, tag = 'scoped memory for tpu_custom_call.1']
    #allocation6 [shape = 'u8[1024]{0}', space=vmem, size = 0x400, scoped, tag = 'output window, operand 0, single buffered']
    %11 = vsyncpa [#allocation4], 0
    %12 = vsyncpa [#allocation5], 0
    // Predicated region
    $region2: #{tpu_custom_call.1} parent=1 // pred_check
      _
    $region3: #{tpu_custom_call.1} parent=1 // pred_check_branch
      %14 = sbr.rel (0) target = $region5
    $region4: #{tpu_custom_call.1} parent=1 // pred_region
      _
    $region5: #{tpu_custom_call.1} parent=1 // pred_fallthru
      _
    // Predicated region
    $region6: #{tpu_custom_call.1} parent=1 // pred_check
      _
    $region7: #{tpu_custom_call.1} parent=1 // pred_check_branch
      %16 = sbr.rel (0) target = $region9
    $region8: #{tpu_custom_call.1} parent=1 // pred_region
      _
    $region9: #{tpu_custom_call.1} parent=1 // pred_fallthru
      _
    // Predicated region
    $region10: #{tpu_custom_call.1} parent=1 // pred_check
      _
    $region11: #{tpu_custom_call.1} parent=1 // pred_check_branch
      %18 = sbr.rel (0) target = $region13
    $region12: #{tpu_custom_call.1} parent=1 // pred_region
      %s20 = ssub.s32 2560, 2560
      %21 = vsyncadd [#allocation4], %s20
      %s22 = sshll.u32 [#allocation3], 4
      %s23 = int_to_ptr.vmem [resolvable:$true] %s22
      %28 = dma.hbm_to_vmem [thread:$0]  %s2, 2560, %s23, [#allocation4], 128, 128, 8
    $region13: #{tpu_custom_call.1} parent=1 // pred_fallthru
      _
    // Predicated region
    $region14: #{tpu_custom_call.1} parent=1 // pred_check
      _
    $region15: #{tpu_custom_call.1} parent=1 // pred_check_branch
      %30 = sbr.rel (0) target = $region17
    $region16: #{tpu_custom_call.1} parent=1 // pred_region
      _
    $region17: #{tpu_custom_call.1} parent=1 // pred_fallthru
      _
    // Predicated region
    $region18: #{tpu_custom_call.1} parent=1 // pred_check
      _
    $region19: #{tpu_custom_call.1} parent=1 // pred_check_branch
      %32 = sbr.rel (0) target = $region21
    $region20: #{tpu_custom_call.1} parent=1 // pred_region
      _
    $region21: #{tpu_custom_call.1} parent=1 // pred_fallthru
      _
    // Predicated region
    $region22: #{tpu_custom_call.1} parent=1 // pred_check
      _
    $region23: #{tpu_custom_call.1} parent=1 // pred_check_branch
      %34 = sbr.rel (0) target = $region25
    $region24: #{tpu_custom_call.1} parent=1 // pred_region
      _
    $region25: #{tpu_custom_call.1} parent=1 // pred_fallthru
      _
    // Predicated region
    $region26: #{tpu_custom_call.1} parent=1 // pred_check
      _
    $region27: #{tpu_custom_call.1} parent=1 // pred_check_branch
      %36 = sbr.rel (0) target = $region29
    $region28: #{tpu_custom_call.1} parent=1 // pred_region
      %37 = dma.done [#allocation4], 2560
    $region29: #{tpu_custom_call.1} parent=1 // pred_fallthru
      _
    %v38 = vld [vmem:[%s0] sm:$0xff]
    %v39 = vld [vmem:[%s0 + $0x8] sm:$0xff]
    %v40 = vld [vmem:[%s0 + $0x10] sm:$0xff]
    %v41 = vld [vmem:[%s0 + $0x18] sm:$0xff]
    %v42 = vlaneseq
    %v43 = vand.u32 %v42, 127
    %44 = vset.pattern.permute.xlu0 0
    %45 = vperm.xlu0 %44, %v38
    %v46 = vpop.permute.xlu0 %45
    %47 = vset.pattern.permute.xlu0 0
    %48 = vperm.xlu0 %47, %v39
    %v49 = vpop.permute.xlu0 %48
    %50 = vset.pattern.permute.xlu0 0
    %51 = vperm.xlu0 %50, %v40
    %v52 = vpop.permute.xlu0 %51
    %53 = vset.pattern.permute.xlu0 0
    %54 = vperm.xlu0 %53, %v41
    %v55 = vpop.permute.xlu0 %54
    %vm56 = vcmp.eq.s32.totalorder %v43, %v46
    %vm57 = vcmp.eq.s32.totalorder %v43, %v49
    %vm58 = vcmp.eq.s32.totalorder %v43, %v52
    %vm59 = vcmp.eq.s32.totalorder %v43, %v55
    %v60 = vsel %vm56, 1, 0
    %v61 = vsel %vm57, 1, 0
    %v62 = vsel %vm58, 1, 0
    %v63 = vsel %vm59, 1, 0
    %v64 = vcvt.s32.f32 %v60
    %v65 = vcvt.s32.f32 %v61
    %v66 = vcvt.s32.f32 %v62
    %v67 = vcvt.s32.f32 %v63
    %v68 = vld [vmem:[%s1] sm:$0xff]
    %v69 = vld [vmem:[%s1 + $0x8] sm:$0xff]
    %v70 = vld [vmem:[%s1 + $0x10] sm:$0xff]
    %v71 = vld [vmem:[%s1 + $0x18] sm:$0xff]
    %v72 = vld [vmem:[%s1 + $0x20] sm:$0xff]
    %v73 = vld [vmem:[%s1 + $0x28] sm:$0xff]
    %v74 = vld [vmem:[%s1 + $0x30] sm:$0x3]
    %vm75 = vcmask 408576
    %v77 = vsel %vm75, %v64, 0
    %v80 = vsel %vm75, %v65, 0
    %v83 = vsel %vm75, %v66, 0
    %v86 = vsel %vm75, %v67, 0
    %vm88 = vcmask 1041408
    %v90 = vsel %vm88, %v74, 0
    %92 = vmatprep.subr.mxu0 0.0
    %93 = vmatpush1.msra.mxu0 %v68
    %94 = vmatprep.subr.mxu0 0.0
    %95 = vmatpush1.msra.mxu0 %v69
    %96 = vmatprep.subr.mxu0 0.0
    %97 = vmatpush1.msra.mxu0 %v70
    %98 = vmatprep.subr.mxu0 0.0
    %99 = vmatpush1.msra.mxu0 %v71
    %100 = vmatprep.subr.mxu0 0.0
    %101 = vmatpush1.msra.mxu0 %v72
    %102 = vmatprep.subr.mxu0 0.0
    %103 = vmatpush1.msra.mxu0 %v73
    %104 = vmatprep.subr.mxu0 0.0
    %105 = vmatpush1.msra.mxu0 %v90
    %106 = vmatprep.subr.mxu0 0.0
    %107 = vmatpush1.msra.mxu0 0.0
    %108 = vmatprep.subr.mxu0 0.0
    %109 = vmatpush1.msra.mxu0 0.0
    %110 = vmatprep.subr.mxu0 0.0
    %111 = vmatpush1.msra.mxu0 0.0
    %112 = vmatprep.subr.mxu0 0.0
    %113 = vmatpush1.msra.mxu0 0.0
    %114 = vmatprep.subr.mxu0 0.0
    %115 = vmatpush1.msra.mxu0 0.0
    %116 = vmatprep.subr.mxu0 0.0
    %117 = vmatpush1.msra.mxu0 0.0
    %118 = vmatprep.subr.mxu0 0.0
    %119 = vmatpush1.msra.mxu0 0.0
    %120 = vmatprep.subr.mxu0 0.0
    %121 = vmatpush1.msra.mxu0 0.0
    %122 = vmatprep.subr.mxu0 0.0
    %123 = vmatpush1.msra.mxu0 0.0
    %124 = vmatprep.subr.mxu0 0.0
    %125 = vmatpush1.msra.mxu0 0.0
    %126 = vmatprep.subr.mxu0 0.0
    %127 = vmatpush1.msra.mxu0 0.0
    %128 = vmatprep.subr.mxu0 0.0
    %129 = vmatpush1.msra.mxu0 0.0
    %130 = vmatprep.subr.mxu0 0.0
    %131 = vmatpush1.msra.mxu0 0.0
    %132 = vmatprep.subr.mxu0 0.0
    %133 = vmatpush1.msra.mxu0 0.0
    %134 = vmatprep.subr.mxu0 0.0
    %135 = vmatpush1.msra.mxu0 0.0
    %136 = vmatprep.subr.mxu0 0.0
    %137 = vmatpush1.msra.mxu0 0.0
    %138 = vmatprep.subr.mxu0 0.0
    %139 = vmatpush1.msra.mxu0 0.0
    %140 = vmatprep.subr.mxu0 0.0
    %141 = vmatpush1.msra.mxu0 0.0
    %142 = vmatprep.subr.mxu0 0.0
    %143 = vmatpush1.msra.mxu0 0.0
    %144 = vmatprep.subr.mxu0 0.0
    %145 = vmatpush1.msra.mxu0 0.0
    %146 = vmatprep.subr.mxu0 0.0
    %147 = vmatpush1.msra.mxu0 0.0
    %148 = vmatprep.subr.mxu0 0.0
    %149 = vmatpush1.msra.mxu0 0.0
    %150 = vmatprep.subr.mxu0 0.0
    %151 = vmatpush1.msra.mxu0 0.0
    %152 = vmatprep.subr.mxu0 0.0
    %153 = vmatpush1.msra.mxu0 0.0
    %154 = vmatprep.subr.mxu0 0.0
    %155 = vmatpush1.msra.mxu0 0.0
    %156 = vmatprep.mubr.f32.mxu0 0.0
    %157 = vmatmul.mubr.f32.gmra.mrb[0].mxu0 %v77
    %v158 = vpop.f32.mrb[0].mxu0
    %v159 = vadd.f32 0.0, %v158
    %v160 = vpop.f32.mrb[0].mxu0
    %161 = vmatprep.mubr.f32.mxu0 0.0
    %162 = vmatmul.mubr.f32.gmra.mrb[0].mxu0 %v80
    %v163 = vpop.f32.mrb[0].mxu0
    %v164 = vadd.f32 0.0, %v163
    %v165 = vpop.f32.mrb[0].mxu0
    %166 = vmatprep.mubr.f32.mxu0 0.0
    %167 = vmatmul.mubr.f32.gmra.mrb[0].mxu0 %v83
    %v168 = vpop.f32.mrb[0].mxu0
    %v169 = vadd.f32 0.0, %v168
    %v170 = vpop.f32.mrb[0].mxu0
    %171 = vmatprep.mubr.f32.mxu0 0.0
    %172 = vmatmul.mubr.f32.gmra.mrb[0].mxu0 %v86
    %v173 = vpop.f32.mrb[0].mxu0
    %v174 = vadd.f32 0.0, %v173
    %v175 = vpop.f32.mrb[0].mxu0
    %176 = vdwg.mxu0
    %vm177 = vcmask 261120
    %178 = vst.msk [vmem:[#allocation2] sm:$0xff] %vm177, 0.0
    %179 = vst.msk [vmem:[#allocation2 + $0x8] sm:$0xff] %vm177, 0.0
    %vm180 = vcmask 257024
    %181 = vst.msk [vmem:[#allocation2 + $0x10] sm:$0xf] %vm180, 0.0
    %182 = vst.msk [vmem:[#allocation2 + $0x18] sm:$0xff] %vm177, 0.0
    %183 = vst.msk [vmem:[#allocation2 + $0x20] sm:$0xff] %vm177, 0.0
    %184 = vst.msk [vmem:[#allocation2 + $0x28] sm:$0xf] %vm180, 0.0
    %185 = vst.msk [vmem:[#allocation2 + $0x2] sm:$0xff] %vm177, %v159
    %186 = vst.msk [vmem:[#allocation2 + $0xa] sm:$0xff] %vm177, %v164
    %s187 = scalar_lea.vmem [#allocation2], 24
    %188 = vst.msk [vmem:[%s187 + $0x2] sm:$0xff] %vm177, %v169
    %189 = vst.msk [vmem:[%s187 + $0xa] sm:$0xff] %vm177, %v174
    %v190 = vld [vmem:[#allocation2] sm:$0xff]
    %v191 = vld [vmem:[#allocation2 + $0x8] sm:$0xff]
    %v192 = vld [vmem:[#allocation3] sm:$0xff]
    %v193 = vld [vmem:[#allocation3 + $0x8] sm:$0xff]
    %v194 = vld [vmem:[#allocation3 + $0x10] sm:$0xff]
    %v195 = vld [vmem:[#allocation3 + $0x18] sm:$0xff]
    %v196 = vld [vmem:[#allocation2 + $0x1] sm:$0xff]
    %v197 = vld [vmem:[#allocation2 + $0x9] sm:$0xff]
    %s198 = scalar_lea.vmem [#allocation3], 32
    %v199 = vld [vmem:[%s198] sm:$0xff]
    %v200 = vld [vmem:[%s198 + $0x8] sm:$0xff]
    %v201 = vld [vmem:[%s198 + $0x10] sm:$0xff]
    %v202 = vld [vmem:[%s198 + $0x18] sm:$0xff]
    %v204 = vsel %vm177, %v196, 0
    %v207 = vsel %vm177, %v197, 0
    %209 = vmatprep.subr.mxu0 0.0
    %210 = vmatpush1.msra.mxu0 %v199
    %211 = vmatprep.subr.mxu0 0.0
    %212 = vmatpush1.msra.mxu0 %v200
    %213 = vmatprep.subr.mxu0 0.0
    %214 = vmatpush1.msra.mxu0 %v201
    %215 = vmatprep.subr.mxu0 0.0
    %216 = vmatpush1.msra.mxu0 %v202
    %217 = vmatprep.subr.mxu0 0.0
    %218 = vmatpush1.msra.mxu0 0.0
    %219 = vmatprep.subr.mxu0 0.0
    %220 = vmatpush1.msra.mxu0 0.0
    %221 = vmatprep.subr.mxu0 0.0
    %222 = vmatpush1.msra.mxu0 0.0
    %223 = vmatprep.subr.mxu0 0.0
    %224 = vmatpush1.msra.mxu0 0.0
    %225 = vmatprep.subr.mxu0 0.0
    %226 = vmatpush1.msra.mxu0 0.0
    %227 = vmatprep.subr.mxu0 0.0
    %228 = vmatpush1.msra.mxu0 0.0
    %229 = vmatprep.subr.mxu0 0.0
    %230 = vmatpush1.msra.mxu0 0.0
    %231 = vmatprep.subr.mxu0 0.0
    %232 = vmatpush1.msra.mxu0 0.0
    %233 = vmatprep.subr.mxu0 0.0
    %234 = vmatpush1.msra.mxu0 0.0
    %235 = vmatprep.subr.mxu0 0.0
    %236 = vmatpush1.msra.mxu0 0.0
    %237 = vmatprep.subr.mxu0 0.0
    %238 = vmatpush1.msra.mxu0 0.0
    %239 = vmatprep.subr.mxu0 0.0
    %240 = vmatpush1.msra.mxu0 0.0
    %241 = vmatprep.subr.mxu0 0.0
    %242 = vmatpush1.msra.mxu0 0.0
    %243 = vmatprep.subr.mxu0 0.0
    %244 = vmatpush1.msra.mxu0 0.0
    %245 = vmatprep.subr.mxu0 0.0
    %246 = vmatpush1.msra.mxu0 0.0
    %247 = vmatprep.subr.mxu0 0.0
    %248 = vmatpush1.msra.mxu0 0.0
    %249 = vmatprep.subr.mxu0 0.0
    %250 = vmatpush1.msra.mxu0 0.0
    %251 = vmatprep.subr.mxu0 0.0
    %252 = vmatpush1.msra.mxu0 0.0
    %253 = vmatprep.subr.mxu0 0.0
    %254 = vmatpush1.msra.mxu0 0.0
    %255 = vmatprep.subr.mxu0 0.0
    %256 = vmatpush1.msra.mxu0 0.0
    %257 = vmatprep.subr.mxu0 0.0
    %258 = vmatpush1.msra.mxu0 0.0
    %259 = vmatprep.subr.mxu0 0.0
    %260 = vmatpush1.msra.mxu0 0.0
    %261 = vmatprep.subr.mxu0 0.0
    %262 = vmatpush1.msra.mxu0 0.0
    %263 = vmatprep.subr.mxu0 0.0
    %264 = vmatpush1.msra.mxu0 0.0
    %265 = vmatprep.subr.mxu0 0.0
    %266 = vmatpush1.msra.mxu0 0.0
    %267 = vmatprep.subr.mxu0 0.0
    %268 = vmatpush1.msra.mxu0 0.0
    %269 = vmatprep.subr.mxu0 0.0
    %270 = vmatpush1.msra.mxu0 0.0
    %271 = vmatprep.subr.mxu0 0.0
    %272 = vmatpush1.msra.mxu0 0.0
    %273 = vmatprep.mubr.f32.mxu0 0.0
    %274 = vmatmul.mubr.f32.gmra.mrb[0].mxu0 %v204
    %v275 = vpop.f32.mrb[0].mxu0
    %v276 = vadd.f32 0.0, %v275
    %v277 = vpop.f32.mrb[0].mxu0
    %278 = vmatprep.mubr.f32.mxu0 0.0
    %279 = vmatmul.mubr.f32.gmra.mrb[0].mxu0 %v207
    %v280 = vpop.f32.mrb[0].mxu0
    %v281 = vadd.f32 0.0, %v280
    %v282 = vpop.f32.mrb[0].mxu0
    %283 = vdwg.mxu0
    %v285 = vsel %vm177, %v190, 0
    %v288 = vsel %vm177, %v191, 0
    %290 = vmatprep.subr.mxu0 0.0
    %291 = vmatpush1.msra.mxu0 %v192
    %292 = vmatprep.subr.mxu0 0.0
    %293 = vmatpush1.msra.mxu0 %v193
    %294 = vmatprep.subr.mxu0 0.0
    %295 = vmatpush1.msra.mxu0 %v194
    %296 = vmatprep.subr.mxu0 0.0
    %297 = vmatpush1.msra.mxu0 %v195
    %298 = vmatprep.subr.mxu0 0.0
    %299 = vmatpush1.msra.mxu0 0.0
    %300 = vmatprep.subr.mxu0 0.0
    %301 = vmatpush1.msra.mxu0 0.0
    %302 = vmatprep.subr.mxu0 0.0
    %303 = vmatpush1.msra.mxu0 0.0
    %304 = vmatprep.subr.mxu0 0.0
    %305 = vmatpush1.msra.mxu0 0.0
    %306 = vmatprep.subr.mxu0 0.0
    %307 = vmatpush1.msra.mxu0 0.0
    %308 = vmatprep.subr.mxu0 0.0
    %309 = vmatpush1.msra.mxu0 0.0
    %310 = vmatprep.subr.mxu0 0.0
    %311 = vmatpush1.msra.mxu0 0.0
    %312 = vmatprep.subr.mxu0 0.0
    %313 = vmatpush1.msra.mxu0 0.0
    %314 = vmatprep.subr.mxu0 0.0
    %315 = vmatpush1.msra.mxu0 0.0
    %316 = vmatprep.subr.mxu0 0.0
    %317 = vmatpush1.msra.mxu0 0.0
    %318 = vmatprep.subr.mxu0 0.0
    %319 = vmatpush1.msra.mxu0 0.0
    %320 = vmatprep.subr.mxu0 0.0
    %321 = vmatpush1.msra.mxu0 0.0
    %322 = vmatprep.subr.mxu0 0.0
    %323 = vmatpush1.msra.mxu0 0.0
    %324 = vmatprep.subr.mxu0 0.0
    %325 = vmatpush1.msra.mxu0 0.0
    %326 = vmatprep.subr.mxu0 0.0
    %327 = vmatpush1.msra.mxu0 0.0
    %328 = vmatprep.subr.mxu0 0.0
    %329 = vmatpush1.msra.mxu0 0.0
    %330 = vmatprep.subr.mxu0 0.0
    %331 = vmatpush1.msra.mxu0 0.0
    %332 = vmatprep.subr.mxu0 0.0
    %333 = vmatpush1.msra.mxu0 0.0
    %334 = vmatprep.subr.mxu0 0.0
    %335 = vmatpush1.msra.mxu0 0.0
    %336 = vmatprep.subr.mxu0 0.0
    %337 = vmatpush1.msra.mxu0 0.0
    %338 = vmatprep.subr.mxu0 0.0
    %339 = vmatpush1.msra.mxu0 0.0
    %340 = vmatprep.subr.mxu0 0.0
    %341 = vmatpush1.msra.mxu0 0.0
    %342 = vmatprep.subr.mxu0 0.0
    %343 = vmatpush1.msra.mxu0 0.0
    %344 = vmatprep.subr.mxu0 0.0
    %345 = vmatpush1.msra.mxu0 0.0
    %346 = vmatprep.subr.mxu0 0.0
    %347 = vmatpush1.msra.mxu0 0.0
    %348 = vmatprep.subr.mxu0 0.0
    %349 = vmatpush1.msra.mxu0 0.0
    %350 = vmatprep.subr.mxu0 0.0
    %351 = vmatpush1.msra.mxu0 0.0
    %352 = vmatprep.subr.mxu0 0.0
    %353 = vmatpush1.msra.mxu0 0.0
    %354 = vmatprep.mubr.f32.mxu0 0.0
    %355 = vmatmul.mubr.f32.gmra.mrb[0].mxu0 %v285
    %v356 = vpop.f32.mrb[0].mxu0
    %v357 = vadd.f32 %v276, %v356
    %v358 = vpop.f32.mrb[0].mxu0
    %359 = vmatprep.mubr.f32.mxu0 0.0
    %360 = vmatmul.mubr.f32.gmra.mrb[0].mxu0 %v288
    %v361 = vpop.f32.mrb[0].mxu0
    %v362 = vadd.f32 %v281, %v361
    %v363 = vpop.f32.mrb[0].mxu0
    %364 = vdwg.mxu0
    %v365 = vld [vmem:[#allocation2 + $0x2] sm:$0xff]
    %v366 = vld [vmem:[#allocation2 + $0xa] sm:$0xff]
    %s367 = scalar_lea.vmem [#allocation3], 64
    %v368 = vld [vmem:[%s367] sm:$0xff]
    %v369 = vld [vmem:[%s367 + $0x8] sm:$0xff]
    %v370 = vld [vmem:[%s367 + $0x10] sm:$0xff]
    %v371 = vld [vmem:[%s367 + $0x18] sm:$0xff]
    %v373 = vsel %vm177, %v365, 0
    %v376 = vsel %vm177, %v366, 0
    %378 = vmatprep.subr.mxu0 0.0
    %379 = vmatpush1.msra.mxu0 %v368
    %380 = vmatprep.subr.mxu0 0.0
    %381 = vmatpush1.msra.mxu0 %v369
    %382 = vmatprep.subr.mxu0 0.0
    %383 = vmatpush1.msra.mxu0 %v370
    %384 = vmatprep.subr.mxu0 0.0
    %385 = vmatpush1.msra.mxu0 %v371
    %386 = vmatprep.subr.mxu0 0.0
    %387 = vmatpush1.msra.mxu0 0.0
    %388 = vmatprep.subr.mxu0 0.0
    %389 = vmatpush1.msra.mxu0 0.0
    %390 = vmatprep.subr.mxu0 0.0
    %391 = vmatpush1.msra.mxu0 0.0
    %392 = vmatprep.subr.mxu0 0.0
    %393 = vmatpush1.msra.mxu0 0.0
    %394 = vmatprep.subr.mxu0 0.0
    %395 = vmatpush1.msra.mxu0 0.0
    %396 = vmatprep.subr.mxu0 0.0
    %397 = vmatpush1.msra.mxu0 0.0
    %398 = vmatprep.subr.mxu0 0.0
    %399 = vmatpush1.msra.mxu0 0.0
    %400 = vmatprep.subr.mxu0 0.0
    %401 = vmatpush1.msra.mxu0 0.0
    %402 = vmatprep.subr.mxu0 0.0
    %403 = vmatpush1.msra.mxu0 0.0
    %404 = vmatprep.subr.mxu0 0.0
    %405 = vmatpush1.msra.mxu0 0.0
    %406 = vmatprep.subr.mxu0 0.0
    %407 = vmatpush1.msra.mxu0 0.0
    %408 = vmatprep.subr.mxu0 0.0
    %409 = vmatpush1.msra.mxu0 0.0
    %410 = vmatprep.subr.mxu0 0.0
    %411 = vmatpush1.msra.mxu0 0.0
    %412 = vmatprep.subr.mxu0 0.0
    %413 = vmatpush1.msra.mxu0 0.0
    %414 = vmatprep.subr.mxu0 0.0
    %415 = vmatpush1.msra.mxu0 0.0
    %416 = vmatprep.subr.mxu0 0.0
    %417 = vmatpush1.msra.mxu0 0.0
    %418 = vmatprep.subr.mxu0 0.0
    %419 = vmatpush1.msra.mxu0 0.0
    %420 = vmatprep.subr.mxu0 0.0
    %421 = vmatpush1.msra.mxu0 0.0
    %422 = vmatprep.subr.mxu0 0.0
    %423 = vmatpush1.msra.mxu0 0.0
    %424 = vmatprep.subr.mxu0 0.0
    %425 = vmatpush1.msra.mxu0 0.0
    %426 = vmatprep.subr.mxu0 0.0
    %427 = vmatpush1.msra.mxu0 0.0
    %428 = vmatprep.subr.mxu0 0.0
    %429 = vmatpush1.msra.mxu0 0.0
    %430 = vmatprep.subr.mxu0 0.0
    %431 = vmatpush1.msra.mxu0 0.0
    %432 = vmatprep.subr.mxu0 0.0
    %433 = vmatpush1.msra.mxu0 0.0
    %434 = vmatprep.subr.mxu0 0.0
    %435 = vmatpush1.msra.mxu0 0.0
    %436 = vmatprep.subr.mxu0 0.0
    %437 = vmatpush1.msra.mxu0 0.0
    %438 = vmatprep.subr.mxu0 0.0
    %439 = vmatpush1.msra.mxu0 0.0
    %440 = vmatprep.subr.mxu0 0.0
    %441 = vmatpush1.msra.mxu0 0.0
    %442 = vmatprep.mubr.f32.mxu0 0.0
    %443 = vmatmul.mubr.f32.gmra.mrb[0].mxu0 %v373
    %v444 = vpop.f32.mrb[0].mxu0
    %v445 = vadd.f32 0.0, %v444
    %v446 = vpop.f32.mrb[0].mxu0
    %447 = vmatprep.mubr.f32.mxu0 0.0
    %448 = vmatmul.mubr.f32.gmra.mrb[0].mxu0 %v376
    %v449 = vpop.f32.mrb[0].mxu0
    %v450 = vadd.f32 0.0, %v449
    %v451 = vpop.f32.mrb[0].mxu0
    %452 = vdwg.mxu0
    %v453 = vadd.f32 %v357, %v445
    %v454 = vadd.f32 %v362, %v450
    %v455 = vld [vmem:[#allocation2 + $0x3] sm:$0xff]
    %v456 = vld [vmem:[#allocation2 + $0xb] sm:$0xff]
    %s457 = scalar_lea.vmem [#allocation3], 96
    %v458 = vld [vmem:[%s457] sm:$0xff]
    %v459 = vld [vmem:[%s457 + $0x8] sm:$0xff]
    %v460 = vld [vmem:[%s457 + $0x10] sm:$0xff]
    %v461 = vld [vmem:[%s457 + $0x18] sm:$0xff]
    %v463 = vsel %vm177, %v455, 0
    %v466 = vsel %vm177, %v456, 0
    %468 = vmatprep.subr.mxu0 0.0
    %469 = vmatpush1.msra.mxu0 %v458
    %470 = vmatprep.subr.mxu0 0.0
    %471 = vmatpush1.msra.mxu0 %v459
    %472 = vmatprep.subr.mxu0 0.0
    %473 = vmatpush1.msra.mxu0 %v460
    %474 = vmatprep.subr.mxu0 0.0
    %475 = vmatpush1.msra.mxu0 %v461
    %476 = vmatprep.subr.mxu0 0.0
    %477 = vmatpush1.msra.mxu0 0.0
    %478 = vmatprep.subr.mxu0 0.0
    %479 = vmatpush1.msra.mxu0 0.0
    %480 = vmatprep.subr.mxu0 0.0
    %481 = vmatpush1.msra.mxu0 0.0
    %482 = vmatprep.subr.mxu0 0.0
    %483 = vmatpush1.msra.mxu0 0.0
    %484 = vmatprep.subr.mxu0 0.0
    %485 = vmatpush1.msra.mxu0 0.0
    %486 = vmatprep.subr.mxu0 0.0
    %487 = vmatpush1.msra.mxu0 0.0
    %488 = vmatprep.subr.mxu0 0.0
    %489 = vmatpush1.msra.mxu0 0.0
    %490 = vmatprep.subr.mxu0 0.0
    %491 = vmatpush1.msra.mxu0 0.0
    %492 = vmatprep.subr.mxu0 0.0
    %493 = vmatpush1.msra.mxu0 0.0
    %494 = vmatprep.subr.mxu0 0.0
    %495 = vmatpush1.msra.mxu0 0.0
    %496 = vmatprep.subr.mxu0 0.0
    %497 = vmatpush1.msra.mxu0 0.0
    %498 = vmatprep.subr.mxu0 0.0
    %499 = vmatpush1.msra.mxu0 0.0
    %500 = vmatprep.subr.mxu0 0.0
    %501 = vmatpush1.msra.mxu0 0.0
    %502 = vmatprep.subr.mxu0 0.0
    %503 = vmatpush1.msra.mxu0 0.0
    %504 = vmatprep.subr.mxu0 0.0
    %505 = vmatpush1.msra.mxu0 0.0
    %506 = vmatprep.subr.mxu0 0.0
    %507 = vmatpush1.msra.mxu0 0.0
    %508 = vmatprep.subr.mxu0 0.0
    %509 = vmatpush1.msra.mxu0 0.0
    %510 = vmatprep.subr.mxu0 0.0
    %511 = vmatpush1.msra.mxu0 0.0
    %512 = vmatprep.subr.mxu0 0.0
    %513 = vmatpush1.msra.mxu0 0.0
    %514 = vmatprep.subr.mxu0 0.0
    %515 = vmatpush1.msra.mxu0 0.0
    %516 = vmatprep.subr.mxu0 0.0
    %517 = vmatpush1.msra.mxu0 0.0
    %518 = vmatprep.subr.mxu0 0.0
    %519 = vmatpush1.msra.mxu0 0.0
    %520 = vmatprep.subr.mxu0 0.0
    %521 = vmatpush1.msra.mxu0 0.0
    %522 = vmatprep.subr.mxu0 0.0
    %523 = vmatpush1.msra.mxu0 0.0
    %524 = vmatprep.subr.mxu0 0.0
    %525 = vmatpush1.msra.mxu0 0.0
    %526 = vmatprep.subr.mxu0 0.0
    %527 = vmatpush1.msra.mxu0 0.0
    %528 = vmatprep.subr.mxu0 0.0
    %529 = vmatpush1.msra.mxu0 0.0
    %530 = vmatprep.subr.mxu0 0.0
    %531 = vmatpush1.msra.mxu0 0.0
    %532 = vmatprep.mubr.f32.mxu0 0.0
    %533 = vmatmul.mubr.f32.gmra.mrb[0].mxu0 %v463
    %v534 = vpop.f32.mrb[0].mxu0
    %v535 = vadd.f32 0.0, %v534
    %v536 = vpop.f32.mrb[0].mxu0
    %537 = vmatprep.mubr.f32.mxu0 0.0
    %538 = vmatmul.mubr.f32.gmra.mrb[0].mxu0 %v466
    %v539 = vpop.f32.mrb[0].mxu0
    %v540 = vadd.f32 0.0, %v539
    %v541 = vpop.f32.mrb[0].mxu0
    %542 = vdwg.mxu0
    %v543 = vadd.f32 %v453, %v535
    %v544 = vadd.f32 %v454, %v540
    %v545 = vld [vmem:[#allocation2 + $0x4] sm:$0xff]
    %v546 = vld [vmem:[#allocation2 + $0xc] sm:$0xff]
    %s547 = scalar_lea.vmem [#allocation3], 128
    %v548 = vld [vmem:[%s547] sm:$0xff]
    %v549 = vld [vmem:[%s547 + $0x8] sm:$0xff]
    %v550 = vld [vmem:[%s547 + $0x10] sm:$0xff]
    %v551 = vld [vmem:[%s547 + $0x18] sm:$0xff]
    %v553 = vsel %vm177, %v545, 0
    %v556 = vsel %vm177, %v546, 0
    %558 = vmatprep.subr.mxu0 0.0
    %559 = vmatpush1.msra.mxu0 %v548
    %560 = vmatprep.subr.mxu0 0.0
    %561 = vmatpush1.msra.mxu0 %v549
    %562 = vmatprep.subr.mxu0 0.0
    %563 = vmatpush1.msra.mxu0 %v550
    %564 = vmatprep.subr.mxu0 0.0
    %565 = vmatpush1.msra.mxu0 %v551
    %566 = vmatprep.subr.mxu0 0.0
    %567 = vmatpush1.msra.mxu0 0.0
    %568 = vmatprep.subr.mxu0 0.0
    %569 = vmatpush1.msra.mxu0 0.0
    %570 = vmatprep.subr.mxu0 0.0
    %571 = vmatpush1.msra.mxu0 0.0
    %572 = vmatprep.subr.mxu0 0.0
    %573 = vmatpush1.msra.mxu0 0.0
    %574 = vmatprep.subr.mxu0 0.0
    %575 = vmatpush1.msra.mxu0 0.0
    %576 = vmatprep.subr.mxu0 0.0
    %577 = vmatpush1.msra.mxu0 0.0
    %578 = vmatprep.subr.mxu0 0.0
    %579 = vmatpush1.msra.mxu0 0.0
    %580 = vmatprep.subr.mxu0 0.0
    %581 = vmatpush1.msra.mxu0 0.0
    %582 = vmatprep.subr.mxu0 0.0
    %583 = vmatpush1.msra.mxu0 0.0
    %584 = vmatprep.subr.mxu0 0.0
    %585 = vmatpush1.msra.mxu0 0.0
    %586 = vmatprep.subr.mxu0 0.0
    %587 = vmatpush1.msra.mxu0 0.0
    %588 = vmatprep.subr.mxu0 0.0
    %589 = vmatpush1.msra.mxu0 0.0
    %590 = vmatprep.subr.mxu0 0.0
    %591 = vmatpush1.msra.mxu0 0.0
    %592 = vmatprep.subr.mxu0 0.0
    %593 = vmatpush1.msra.mxu0 0.0
    %594 = vmatprep.subr.mxu0 0.0
    %595 = vmatpush1.msra.mxu0 0.0
    %596 = vmatprep.subr.mxu0 0.0
    %597 = vmatpush1.msra.mxu0 0.0
    %598 = vmatprep.subr.mxu0 0.0
    %599 = vmatpush1.msra.mxu0 0.0
    %600 = vmatprep.subr.mxu0 0.0
    %601 = vmatpush1.msra.mxu0 0.0
    %602 = vmatprep.subr.mxu0 0.0
    %603 = vmatpush1.msra.mxu0 0.0
    %604 = vmatprep.subr.mxu0 0.0
    %605 = vmatpush1.msra.mxu0 0.0
    %606 = vmatprep.subr.mxu0 0.0
    %607 = vmatpush1.msra.mxu0 0.0
    %608 = vmatprep.subr.mxu0 0.0
    %609 = vmatpush1.msra.mxu0 0.0
    %610 = vmatprep.subr.mxu0 0.0
    %611 = vmatpush1.msra.mxu0 0.0
    %612 = vmatprep.subr.mxu0 0.0
    %613 = vmatpush1.msra.mxu0 0.0
    %614 = vmatprep.subr.mxu0 0.0
    %615 = vmatpush1.msra.mxu0 0.0
    %616 = vmatprep.subr.mxu0 0.0
    %617 = vmatpush1.msra.mxu0 0.0
    %618 = vmatprep.subr.mxu0 0.0
    %619 = vmatpush1.msra.mxu0 0.0
    %620 = vmatprep.subr.mxu0 0.0
    %621 = vmatpush1.msra.mxu0 0.0
    %622 = vmatprep.mubr.f32.mxu0 0.0
    %623 = vmatmul.mubr.f32.gmra.mrb[0].mxu0 %v553
    %v624 = vpop.f32.mrb[0].mxu0
    %v625 = vadd.f32 0.0, %v624
    %v626 = vpop.f32.mrb[0].mxu0
    %627 = vmatprep.mubr.f32.mxu0 0.0
    %628 = vmatmul.mubr.f32.gmra.mrb[0].mxu0 %v556
    %v629 = vpop.f32.mrb[0].mxu0
    %v630 = vadd.f32 0.0, %v629
    %v631 = vpop.f32.mrb[0].mxu0
    %632 = vdwg.mxu0
    %v633 = vadd.f32 %v543, %v625
    %v634 = vadd.f32 %v544, %v630
    %vm635 = vcmask 130048
    %v636 = vsel %vm635, %v633, -inf
    %vm637 = vcmask 128000
    %v638 = vsel %vm637, %v634, -inf
    %v639 = vmax.f32 %v636, %v638
    %v640 = vrot.slane %v639, 4
    %v641 = vmax.f32 %v639, %v640
    %v642 = vrot.slane %v641, 2
    %v643 = vmax.f32 %v641, %v642
    %v644 = vrot.slane %v643, 1
    %v645 = vmax.f32 %v643, %v644
    %vm646 = vcmask 261248
    %v647 = vsel %vm646, %v633, -inf
    %vm648 = vcmask 260224
    %v649 = vsel %vm648, %v634, -inf
    %v650 = vmax.f32 %v647, %v649
    %v651 = vrot.slane %v650, 4
    %v652 = vmax.f32 %v650, %v651
    %v653 = vrot.slane %v652, 2
    %v654 = vmax.f32 %v652, %v653
    %v655 = vrot.slane %v654, 1
    %v656 = vmax.f32 %v654, %v655
    %vm657 = vcmask 392448
    %v658 = vsel %vm657, %v633, -inf
    %v659 = vsel %vm657, %v634, -inf
    %v660 = vmax.f32 %v658, %v659
    %v661 = vrot.slane %v660, 4
    %v662 = vmax.f32 %v660, %v661
    %v663 = vrot.slane %v662, 2
    %v664 = vmax.f32 %v662, %v663
    %v665 = vrot.slane %v664, 1
    %v666 = vmax.f32 %v664, %v665
    %v667 = vld [vmem:[%s3] sm:$0x1]
    %v668 = vadd.f32 %v645, %v667
    %v669 = vadd.f32 %v656, %v667
    %671 = vrot.lane.b32.xlu0 %v669, 112
    %v672 = vpop.permute.xlu0 %671
    %v674 = vmax.f32 %v668, %v672
    %v675 = vadd.f32 %v666, %v667
    %677 = vrot.lane.b32.xlu0 %v675, 96
    %v678 = vpop.permute.xlu0 %677
    %v680 = vmax.f32 %v674, %v678
    %v681 = vmax.f32 %v680, 0.0
    %v682 = vld [vmem:[%s187] sm:$0xff]
    %v683 = vld [vmem:[%s187 + $0x8] sm:$0xff]
    %v684 = vld [vmem:[%s187 + $0x1] sm:$0xff]
    %v685 = vld [vmem:[%s187 + $0x9] sm:$0xff]
    %v687 = vsel %vm177, %v684, 0
    %v690 = vsel %vm177, %v685, 0
    %692 = vmatprep.subr.mxu0 0.0
    %693 = vmatpush1.msra.mxu0 %v199
    %694 = vmatprep.subr.mxu0 0.0
    %695 = vmatpush1.msra.mxu0 %v200
    %696 = vmatprep.subr.mxu0 0.0
    %697 = vmatpush1.msra.mxu0 %v201
    %698 = vmatprep.subr.mxu0 0.0
    %699 = vmatpush1.msra.mxu0 %v202
    %700 = vmatprep.subr.mxu0 0.0
    %701 = vmatpush1.msra.mxu0 0.0
    %702 = vmatprep.subr.mxu0 0.0
    %703 = vmatpush1.msra.mxu0 0.0
    %704 = vmatprep.subr.mxu0 0.0
    %705 = vmatpush1.msra.mxu0 0.0
    %706 = vmatprep.subr.mxu0 0.0
    %707 = vmatpush1.msra.mxu0 0.0
    %708 = vmatprep.subr.mxu0 0.0
    %709 = vmatpush1.msra.mxu0 0.0
    %710 = vmatprep.subr.mxu0 0.0
    %711 = vmatpush1.msra.mxu0 0.0
    %712 = vmatprep.subr.mxu0 0.0
    %713 = vmatpush1.msra.mxu0 0.0
    %714 = vmatprep.subr.mxu0 0.0
    %715 = vmatpush1.msra.mxu0 0.0
    %716 = vmatprep.subr.mxu0 0.0
    %717 = vmatpush1.msra.mxu0 0.0
    %718 = vmatprep.subr.mxu0 0.0
    %719 = vmatpush1.msra.mxu0 0.0
    %720 = vmatprep.subr.mxu0 0.0
    %721 = vmatpush1.msra.mxu0 0.0
    %722 = vmatprep.subr.mxu0 0.0
    %723 = vmatpush1.msra.mxu0 0.0
    %724 = vmatprep.subr.mxu0 0.0
    %725 = vmatpush1.msra.mxu0 0.0
    %726 = vmatprep.subr.mxu0 0.0
    %727 = vmatpush1.msra.mxu0 0.0
    %728 = vmatprep.subr.mxu0 0.0
    %729 = vmatpush1.msra.mxu0 0.0
    %730 = vmatprep.subr.mxu0 0.0
    %731 = vmatpush1.msra.mxu0 0.0
    %732 = vmatprep.subr.mxu0 0.0
    %733 = vmatpush1.msra.mxu0 0.0
    %734 = vmatprep.subr.mxu0 0.0
    %735 = vmatpush1.msra.mxu0 0.0
    %736 = vmatprep.subr.mxu0 0.0
    %737 = vmatpush1.msra.mxu0 0.0
    %738 = vmatprep.subr.mxu0 0.0
    %739 = vmatpush1.msra.mxu0 0.0
    %740 = vmatprep.subr.mxu0 0.0
    %741 = vmatpush1.msra.mxu0 0.0
    %742 = vmatprep.subr.mxu0 0.0
    %743 = vmatpush1.msra.mxu0 0.0
    %744 = vmatprep.subr.mxu0 0.0
    %745 = vmatpush1.msra.mxu0 0.0
    %746 = vmatprep.subr.mxu0 0.0
    %747 = vmatpush1.msra.mxu0 0.0
    %748 = vmatprep.subr.mxu0 0.0
    %749 = vmatpush1.msra.mxu0 0.0
    %750 = vmatprep.subr.mxu0 0.0
    %751 = vmatpush1.msra.mxu0 0.0
    %752 = vmatprep.subr.mxu0 0.0
    %753 = vmatpush1.msra.mxu0 0.0
    %754 = vmatprep.subr.mxu0 0.0
    %755 = vmatpush1.msra.mxu0 0.0
    %756 = vmatprep.mubr.f32.mxu0 0.0
    %757 = vmatmul.mubr.f32.gmra.mrb[0].mxu0 %v687
    %v758 = vpop.f32.mrb[0].mxu0
    %v759 = vadd.f32 0.0, %v758
    %v760 = vpop.f32.mrb[0].mxu0
    %761 = vmatprep.mubr.f32.mxu0 0.0
    %762 = vmatmul.mubr.f32.gmra.mrb[0].mxu0 %v690
    %v763 = vpop.f32.mrb[0].mxu0
    %v764 = vadd.f32 0.0, %v763
    %v765 = vpop.f32.mrb[0].mxu0
    %766 = vdwg.mxu0
    %v768 = vsel %vm177, %v682, 0
    %v771 = vsel %vm177, %v683, 0
    %773 = vmatprep.subr.mxu0 0.0
    %774 = vmatpush1.msra.mxu0 %v192
    %775 = vmatprep.subr.mxu0 0.0
    %776 = vmatpush1.msra.mxu0 %v193
    %777 = vmatprep.subr.mxu0 0.0
    %778 = vmatpush1.msra.mxu0 %v194
    %779 = vmatprep.subr.mxu0 0.0
    %780 = vmatpush1.msra.mxu0 %v195
    %781 = vmatprep.subr.mxu0 0.0
    %782 = vmatpush1.msra.mxu0 0.0
    %783 = vmatprep.subr.mxu0 0.0
    %784 = vmatpush1.msra.mxu0 0.0
    %785 = vmatprep.subr.mxu0 0.0
    %786 = vmatpush1.msra.mxu0 0.0
    %787 = vmatprep.subr.mxu0 0.0
    %788 = vmatpush1.msra.mxu0 0.0
    %789 = vmatprep.subr.mxu0 0.0
    %790 = vmatpush1.msra.mxu0 0.0
    %791 = vmatprep.subr.mxu0 0.0
    %792 = vmatpush1.msra.mxu0 0.0
    %793 = vmatprep.subr.mxu0 0.0
    %794 = vmatpush1.msra.mxu0 0.0
    %795 = vmatprep.subr.mxu0 0.0
    %796 = vmatpush1.msra.mxu0 0.0
    %797 = vmatprep.subr.mxu0 0.0
    %798 = vmatpush1.msra.mxu0 0.0
    %799 = vmatprep.subr.mxu0 0.0
    %800 = vmatpush1.msra.mxu0 0.0
    %801 = vmatprep.subr.mxu0 0.0
    %802 = vmatpush1.msra.mxu0 0.0
    %803 = vmatprep.subr.mxu0 0.0
    %804 = vmatpush1.msra.mxu0 0.0
    %805 = vmatprep.subr.mxu0 0.0
    %806 = vmatpush1.msra.mxu0 0.0
    %807 = vmatprep.subr.mxu0 0.0
    %808 = vmatpush1.msra.mxu0 0.0
    %809 = vmatprep.subr.mxu0 0.0
    %810 = vmatpush1.msra.mxu0 0.0
    %811 = vmatprep.subr.mxu0 0.0
    %812 = vmatpush1.msra.mxu0 0.0
    %813 = vmatprep.subr.mxu0 0.0
    %814 = vmatpush1.msra.mxu0 0.0
    %815 = vmatprep.subr.mxu0 0.0
    %816 = vmatpush1.msra.mxu0 0.0
    %817 = vmatprep.subr.mxu0 0.0
    %818 = vmatpush1.msra.mxu0 0.0
    %819 = vmatprep.subr.mxu0 0.0
    %820 = vmatpush1.msra.mxu0 0.0
    %821 = vmatprep.subr.mxu0 0.0
    %822 = vmatpush1.msra.mxu0 0.0
    %823 = vmatprep.subr.mxu0 0.0
    %824 = vmatpush1.msra.mxu0 0.0
    %825 = vmatprep.subr.mxu0 0.0
    %826 = vmatpush1.msra.mxu0 0.0
    %827 = vmatprep.subr.mxu0 0.0
    %828 = vmatpush1.msra.mxu0 0.0
    %829 = vmatprep.subr.mxu0 0.0
    %830 = vmatpush1.msra.mxu0 0.0
    %831 = vmatprep.subr.mxu0 0.0
    %832 = vmatpush1.msra.mxu0 0.0
    %833 = vmatprep.subr.mxu0 0.0
    %834 = vmatpush1.msra.mxu0 0.0
    %835 = vmatprep.subr.mxu0 0.0
    %836 = vmatpush1.msra.mxu0 0.0
    %837 = vmatprep.mubr.f32.mxu0 0.0
    %838 = vmatmul.mubr.f32.gmra.mrb[0].mxu0 %v768
    %v839 = vpop.f32.mrb[0].mxu0
    %v840 = vadd.f32 %v759, %v839
    %v841 = vpop.f32.mrb[0].mxu0
    %842 = vmatprep.mubr.f32.mxu0 0.0
    %843 = vmatmul.mubr.f32.gmra.mrb[0].mxu0 %v771
    %v844 = vpop.f32.mrb[0].mxu0
    %v845 = vadd.f32 %v764, %v844
    %v846 = vpop.f32.mrb[0].mxu0
    %847 = vdwg.mxu0
    %v848 = vld [vmem:[%s187 + $0x2] sm:$0xff]
    %v849 = vld [vmem:[%s187 + $0xa] sm:$0xff]
    %v851 = vsel %vm177, %v848, 0
    %v854 = vsel %vm177, %v849, 0
    %856 = vmatprep.subr.mxu0 0.0
    %857 = vmatpush1.msra.mxu0 %v368
    %858 = vmatprep.subr.mxu0 0.0
    %859 = vmatpush1.msra.mxu0 %v369
    %860 = vmatprep.subr.mxu0 0.0
    %861 = vmatpush1.msra.mxu0 %v370
    %862 = vmatprep.subr.mxu0 0.0
    %863 = vmatpush1.msra.mxu0 %v371
    %864 = vmatprep.subr.mxu0 0.0
    %865 = vmatpush1.msra.mxu0 0.0
    %866 = vmatprep.subr.mxu0 0.0
    %867 = vmatpush1.msra.mxu0 0.0
    %868 = vmatprep.subr.mxu0 0.0
    %869 = vmatpush1.msra.mxu0 0.0
    %870 = vmatprep.subr.mxu0 0.0
    %871 = vmatpush1.msra.mxu0 0.0
    %872 = vmatprep.subr.mxu0 0.0
    %873 = vmatpush1.msra.mxu0 0.0
    %874 = vmatprep.subr.mxu0 0.0
    %875 = vmatpush1.msra.mxu0 0.0
    %876 = vmatprep.subr.mxu0 0.0
    %877 = vmatpush1.msra.mxu0 0.0
    %878 = vmatprep.subr.mxu0 0.0
    %879 = vmatpush1.msra.mxu0 0.0
    %880 = vmatprep.subr.mxu0 0.0
    %881 = vmatpush1.msra.mxu0 0.0
    %882 = vmatprep.subr.mxu0 0.0
    %883 = vmatpush1.msra.mxu0 0.0
    %884 = vmatprep.subr.mxu0 0.0
    %885 = vmatpush1.msra.mxu0 0.0
    %886 = vmatprep.subr.mxu0 0.0
    %887 = vmatpush1.msra.mxu0 0.0
    %888 = vmatprep.subr.mxu0 0.0
    %889 = vmatpush1.msra.mxu0 0.0
    %890 = vmatprep.subr.mxu0 0.0
    %891 = vmatpush1.msra.mxu0 0.0
    %892 = vmatprep.subr.mxu0 0.0
    %893 = vmatpush1.msra.mxu0 0.0
    %894 = vmatprep.subr.mxu0 0.0
    %895 = vmatpush1.msra.mxu0 0.0
    %896 = vmatprep.subr.mxu0 0.0
    %897 = vmatpush1.msra.mxu0 0.0
    %898 = vmatprep.subr.mxu0 0.0
    %899 = vmatpush1.msra.mxu0 0.0
    %900 = vmatprep.subr.mxu0 0.0
    %901 = vmatpush1.msra.mxu0 0.0
    %902 = vmatprep.subr.mxu0 0.0
    %903 = vmatpush1.msra.mxu0 0.0
    %904 = vmatprep.subr.mxu0 0.0
    %905 = vmatpush1.msra.mxu0 0.0
    %906 = vmatprep.subr.mxu0 0.0
    %907 = vmatpush1.msra.mxu0 0.0
    %908 = vmatprep.subr.mxu0 0.0
    %909 = vmatpush1.msra.mxu0 0.0
    %910 = vmatprep.subr.mxu0 0.0
    %911 = vmatpush1.msra.mxu0 0.0
    %912 = vmatprep.subr.mxu0 0.0
    %913 = vmatpush1.msra.mxu0 0.0
    %914 = vmatprep.subr.mxu0 0.0
    %915 = vmatpush1.msra.mxu0 0.0
    %916 = vmatprep.subr.mxu0 0.0
    %917 = vmatpush1.msra.mxu0 0.0
    %918 = vmatprep.subr.mxu0 0.0
    %919 = vmatpush1.msra.mxu0 0.0
    %920 = vmatprep.mubr.f32.mxu0 0.0
    %921 = vmatmul.mubr.f32.gmra.mrb[0].mxu0 %v851
    %v922 = vpop.f32.mrb[0].mxu0
    %v923 = vadd.f32 0.0, %v922
    %v924 = vpop.f32.mrb[0].mxu0
    %925 = vmatprep.mubr.f32.mxu0 0.0
    %926 = vmatmul.mubr.f32.gmra.mrb[0].mxu0 %v854
    %v927 = vpop.f32.mrb[0].mxu0
    %v928 = vadd.f32 0.0, %v927
    %v929 = vpop.f32.mrb[0].mxu0
    %930 = vdwg.mxu0
    %v931 = vadd.f32 %v840, %v923
    %v932 = vadd.f32 %v845, %v928
    %v933 = vld [vmem:[%s187 + $0x3] sm:$0xff]
    %v934 = vld [vmem:[%s187 + $0xb] sm:$0xff]
    %v936 = vsel %vm177, %v933, 0
    %v939 = vsel %vm177, %v934, 0
    %941 = vmatprep.subr.mxu0 0.0
    %942 = vmatpush1.msra.mxu0 %v458
    %943 = vmatprep.subr.mxu0 0.0
    %944 = vmatpush1.msra.mxu0 %v459
    %945 = vmatprep.subr.mxu0 0.0
    %946 = vmatpush1.msra.mxu0 %v460
    %947 = vmatprep.subr.mxu0 0.0
    %948 = vmatpush1.msra.mxu0 %v461
    %949 = vmatprep.subr.mxu0 0.0
    %950 = vmatpush1.msra.mxu0 0.0
    %951 = vmatprep.subr.mxu0 0.0
    %952 = vmatpush1.msra.mxu0 0.0
    %953 = vmatprep.subr.mxu0 0.0
    %954 = vmatpush1.msra.mxu0 0.0
    %955 = vmatprep.subr.mxu0 0.0
    %956 = vmatpush1.msra.mxu0 0.0
    %957 = vmatprep.subr.mxu0 0.0
    %958 = vmatpush1.msra.mxu0 0.0
    %959 = vmatprep.subr.mxu0 0.0
    %960 = vmatpush1.msra.mxu0 0.0
    %961 = vmatprep.subr.mxu0 0.0
    %962 = vmatpush1.msra.mxu0 0.0
    %963 = vmatprep.subr.mxu0 0.0
    %964 = vmatpush1.msra.mxu0 0.0
    %965 = vmatprep.subr.mxu0 0.0
    %966 = vmatpush1.msra.mxu0 0.0
    %967 = vmatprep.subr.mxu0 0.0
    %968 = vmatpush1.msra.mxu0 0.0
    %969 = vmatprep.subr.mxu0 0.0
    %970 = vmatpush1.msra.mxu0 0.0
    %971 = vmatprep.subr.mxu0 0.0
    %972 = vmatpush1.msra.mxu0 0.0
    %973 = vmatprep.subr.mxu0 0.0
    %974 = vmatpush1.msra.mxu0 0.0
    %975 = vmatprep.subr.mxu0 0.0
    %976 = vmatpush1.msra.mxu0 0.0
    %977 = vmatprep.subr.mxu0 0.0
    %978 = vmatpush1.msra.mxu0 0.0
    %979 = vmatprep.subr.mxu0 0.0
    %980 = vmatpush1.msra.mxu0 0.0
    %981 = vmatprep.subr.mxu0 0.0
    %982 = vmatpush1.msra.mxu0 0.0
    %983 = vmatprep.subr.mxu0 0.0
    %984 = vmatpush1.msra.mxu0 0.0
    %985 = vmatprep.subr.mxu0 0.0
    %986 = vmatpush1.msra.mxu0 0.0
    %987 = vmatprep.subr.mxu0 0.0
    %988 = vmatpush1.msra.mxu0 0.0
    %989 = vmatprep.subr.mxu0 0.0
    %990 = vmatpush1.msra.mxu0 0.0
    %991 = vmatprep.subr.mxu0 0.0
    %992 = vmatpush1.msra.mxu0 0.0
    %993 = vmatprep.subr.mxu0 0.0
    %994 = vmatpush1.msra.mxu0 0.0
    %995 = vmatprep.subr.mxu0 0.0
    %996 = vmatpush1.msra.mxu0 0.0
    %997 = vmatprep.subr.mxu0 0.0
    %998 = vmatpush1.msra.mxu0 0.0
    %999 = vmatprep.subr.mxu0 0.0
    %1000 = vmatpush1.msra.mxu0 0.0
    %1001 = vmatprep.subr.mxu0 0.0
    %1002 = vmatpush1.msra.mxu0 0.0
    %1003 = vmatprep.subr.mxu0 0.0
    %1004 = vmatpush1.msra.mxu0 0.0
    %1005 = vmatprep.mubr.f32.mxu0 0.0
    %1006 = vmatmul.mubr.f32.gmra.mrb[0].mxu0 %v936
    %v1007 = vpop.f32.mrb[0].mxu0
    %v1008 = vadd.f32 0.0, %v1007
    %v1009 = vpop.f32.mrb[0].mxu0
    %1010 = vmatprep.mubr.f32.mxu0 0.0
    %1011 = vmatmul.mubr.f32.gmra.mrb[0].mxu0 %v939
    %v1012 = vpop.f32.mrb[0].mxu0
    %v1013 = vadd.f32 0.0, %v1012
    %v1014 = vpop.f32.mrb[0].mxu0
    %1015 = vdwg.mxu0
    %v1016 = vadd.f32 %v931, %v1008
    %v1017 = vadd.f32 %v932, %v1013
    %v1018 = vld [vmem:[%s187 + $0x4] sm:$0xff]
    %v1019 = vld [vmem:[%s187 + $0xc] sm:$0xff]
    %v1021 = vsel %vm177, %v1018, 0
    %v1024 = vsel %vm177, %v1019, 0
    %1026 = vmatprep.subr.mxu0 0.0
    %1027 = vmatpush1.msra.mxu0 %v548
    %1028 = vmatprep.subr.mxu0 0.0
    %1029 = vmatpush1.msra.mxu0 %v549
    %1030 = vmatprep.subr.mxu0 0.0
    %1031 = vmatpush1.msra.mxu0 %v550
    %1032 = vmatprep.subr.mxu0 0.0
    %1033 = vmatpush1.msra.mxu0 %v551
    %1034 = vmatprep.subr.mxu0 0.0
    %1035 = vmatpush1.msra.mxu0 0.0
    %1036 = vmatprep.subr.mxu0 0.0
    %1037 = vmatpush1.msra.mxu0 0.0
    %1038 = vmatprep.subr.mxu0 0.0
    %1039 = vmatpush1.msra.mxu0 0.0
    %1040 = vmatprep.subr.mxu0 0.0
    %1041 = vmatpush1.msra.mxu0 0.0
    %1042 = vmatprep.subr.mxu0 0.0
    %1043 = vmatpush1.msra.mxu0 0.0
    %1044 = vmatprep.subr.mxu0 0.0
    %1045 = vmatpush1.msra.mxu0 0.0
    %1046 = vmatprep.subr.mxu0 0.0
    %1047 = vmatpush1.msra.mxu0 0.0
    %1048 = vmatprep.subr.mxu0 0.0
    %1049 = vmatpush1.msra.mxu0 0.0
    %1050 = vmatprep.subr.mxu0 0.0
    %1051 = vmatpush1.msra.mxu0 0.0
    %1052 = vmatprep.subr.mxu0 0.0
    %1053 = vmatpush1.msra.mxu0 0.0
    %1054 = vmatprep.subr.mxu0 0.0
    %1055 = vmatpush1.msra.mxu0 0.0
    %1056 = vmatprep.subr.mxu0 0.0
    %1057 = vmatpush1.msra.mxu0 0.0
    %1058 = vmatprep.subr.mxu0 0.0
    %1059 = vmatpush1.msra.mxu0 0.0
    %1060 = vmatprep.subr.mxu0 0.0
    %1061 = vmatpush1.msra.mxu0 0.0
    %1062 = vmatprep.subr.mxu0 0.0
    %1063 = vmatpush1.msra.mxu0 0.0
    %1064 = vmatprep.subr.mxu0 0.0
    %1065 = vmatpush1.msra.mxu0 0.0
    %1066 = vmatprep.subr.mxu0 0.0
    %1067 = vmatpush1.msra.mxu0 0.0
    %1068 = vmatprep.subr.mxu0 0.0
    %1069 = vmatpush1.msra.mxu0 0.0
    %1070 = vmatprep.subr.mxu0 0.0
    %1071 = vmatpush1.msra.mxu0 0.0
    %1072 = vmatprep.subr.mxu0 0.0
    %1073 = vmatpush1.msra.mxu0 0.0
    %1074 = vmatprep.subr.mxu0 0.0
    %1075 = vmatpush1.msra.mxu0 0.0
    %1076 = vmatprep.subr.mxu0 0.0
    %1077 = vmatpush1.msra.mxu0 0.0
    %1078 = vmatprep.subr.mxu0 0.0
    %1079 = vmatpush1.msra.mxu0 0.0
    %1080 = vmatprep.subr.mxu0 0.0
    %1081 = vmatpush1.msra.mxu0 0.0
    %1082 = vmatprep.subr.mxu0 0.0
    %1083 = vmatpush1.msra.mxu0 0.0
    %1084 = vmatprep.subr.mxu0 0.0
    %1085 = vmatpush1.msra.mxu0 0.0
    %1086 = vmatprep.subr.mxu0 0.0
    %1087 = vmatpush1.msra.mxu0 0.0
    %1088 = vmatprep.subr.mxu0 0.0
    %1089 = vmatpush1.msra.mxu0 0.0
    %1090 = vmatprep.mubr.f32.mxu0 0.0
    %1091 = vmatmul.mubr.f32.gmra.mrb[0].mxu0 %v1021
    %v1092 = vpop.f32.mrb[0].mxu0
    %v1093 = vadd.f32 0.0, %v1092
    %v1094 = vpop.f32.mrb[0].mxu0
    %1095 = vmatprep.mubr.f32.mxu0 0.0
    %1096 = vmatmul.mubr.f32.gmra.mrb[0].mxu0 %v1024
    %v1097 = vpop.f32.mrb[0].mxu0
    %v1098 = vadd.f32 0.0, %v1097
    %v1099 = vpop.f32.mrb[0].mxu0
    %1100 = vdwg.mxu0
    %v1101 = vadd.f32 %v1016, %v1093
    %v1102 = vadd.f32 %v1017, %v1098
    %v1103 = vsel %vm635, %v1101, -inf
    %v1104 = vsel %vm637, %v1102, -inf
    %v1105 = vmax.f32 %v1103, %v1104
    %v1106 = vrot.slane %v1105, 4
    %v1107 = vmax.f32 %v1105, %v1106
    %v1108 = vrot.slane %v1107, 2
    %v1109 = vmax.f32 %v1107, %v1108
    %v1110 = vrot.slane %v1109, 1
    %v1111 = vmax.f32 %v1109, %v1110
    %v1112 = vsel %vm646, %v1101, -inf
    %v1113 = vsel %vm648, %v1102, -inf
    %v1114 = vmax.f32 %v1112, %v1113
    %v1115 = vrot.slane %v1114, 4
    %v1116 = vmax.f32 %v1114, %v1115
    %v1117 = vrot.slane %v1116, 2
    %v1118 = vmax.f32 %v1116, %v1117
    %v1119 = vrot.slane %v1118, 1
    %v1120 = vmax.f32 %v1118, %v1119
    %v1121 = vsel %vm657, %v1101, -inf
    %v1122 = vsel %vm657, %v1102, -inf
    %v1123 = vmax.f32 %v1121, %v1122
    %v1124 = vrot.slane %v1123, 4
    %v1125 = vmax.f32 %v1123, %v1124
    %v1126 = vrot.slane %v1125, 2
    %v1127 = vmax.f32 %v1125, %v1126
    %v1128 = vrot.slane %v1127, 1
    %v1129 = vmax.f32 %v1127, %v1128
    %v1130 = vadd.f32 %v1111, %v667
    %v1131 = vadd.f32 %v1120, %v667
    %1133 = vrot.lane.b32.xlu0 %v1131, 112
    %v1134 = vpop.permute.xlu0 %1133
    %v1136 = vmax.f32 %v1130, %v1134
    %v1137 = vadd.f32 %v1129, %v667
    %1139 = vrot.lane.b32.xlu0 %v1137, 96
    %v1140 = vpop.permute.xlu0 %1139
    %v1142 = vmax.f32 %v1136, %v1140
    %v1143 = vmax.f32 %v1142, 0.0
    %v1145 = vrot.slane %v1143, 7
    %vm1147 = vcmask 1040384
    %v1148 = vsel %vm1147, %v681, %v1145
    %v1149 = vld [vmem:[%s4] sm:$0xff]
    %v1150 = vld [vmem:[%s4 + $0x8] sm:$0xff]
    %v1151 = vld [vmem:[%s5] sm:$0x1]
    %v1153 = vlaneseq
    %v1154 = vshrl.u32 %v1153, 7
    %v1155 = vsub.s32 0, %v1154
    %v1156 = vrot.slane %v1151, %v1155
    %v1159 = vsel %vm635, %v1148, 0
    %1161 = vmatprep.subr.mxu0 0.0
    %1162 = vmatpush1.msra.mxu0 %v1149
    %1163 = vmatprep.subr.mxu0 0.0
    %1164 = vmatpush1.msra.mxu0 %v1150
    %1165 = vmatprep.subr.mxu0 0.0
    %1166 = vmatpush1.msra.mxu0 0.0
    %1167 = vmatprep.subr.mxu0 0.0
    %1168 = vmatpush1.msra.mxu0 0.0
    %1169 = vmatprep.subr.mxu0 0.0
    %1170 = vmatpush1.msra.mxu0 0.0
    %1171 = vmatprep.subr.mxu0 0.0
    %1172 = vmatpush1.msra.mxu0 0.0
    %1173 = vmatprep.subr.mxu0 0.0
    %1174 = vmatpush1.msra.mxu0 0.0
    %1175 = vmatprep.subr.mxu0 0.0
    %1176 = vmatpush1.msra.mxu0 0.0
    %1177 = vmatprep.subr.mxu0 0.0
    %1178 = vmatpush1.msra.mxu0 0.0
    %1179 = vmatprep.subr.mxu0 0.0
    %1180 = vmatpush1.msra.mxu0 0.0
    %1181 = vmatprep.subr.mxu0 0.0
    %1182 = vmatpush1.msra.mxu0 0.0
    %1183 = vmatprep.subr.mxu0 0.0
    %1184 = vmatpush1.msra.mxu0 0.0
    %1185 = vmatprep.subr.mxu0 0.0
    %1186 = vmatpush1.msra.mxu0 0.0
    %1187 = vmatprep.subr.mxu0 0.0
    %1188 = vmatpush1.msra.mxu0 0.0
    %1189 = vmatprep.subr.mxu0 0.0
    %1190 = vmatpush1.msra.mxu0 0.0
    %1191 = vmatprep.subr.mxu0 0.0
    %1192 = vmatpush1.msra.mxu0 0.0
    %1193 = vmatprep.subr.mxu0 0.0
    %1194 = vmatpush1.msra.mxu0 0.0
    %1195 = vmatprep.subr.mxu0 0.0
    %1196 = vmatpush1.msra.mxu0 0.0
    %1197 = vmatprep.subr.mxu0 0.0
    %1198 = vmatpush1.msra.mxu0 0.0
    %1199 = vmatprep.subr.mxu0 0.0
    %1200 = vmatpush1.msra.mxu0 0.0
    %1201 = vmatprep.subr.mxu0 0.0
    %1202 = vmatpush1.msra.mxu0 0.0
    %1203 = vmatprep.subr.mxu0 0.0
    %1204 = vmatpush1.msra.mxu0 0.0
    %1205 = vmatprep.subr.mxu0 0.0
    %1206 = vmatpush1.msra.mxu0 0.0
    %1207 = vmatprep.subr.mxu0 0.0
    %1208 = vmatpush1.msra.mxu0 0.0
    %1209 = vmatprep.subr.mxu0 0.0
    %1210 = vmatpush1.msra.mxu0 0.0
    %1211 = vmatprep.subr.mxu0 0.0
    %1212 = vmatpush1.msra.mxu0 0.0
    %1213 = vmatprep.subr.mxu0 0.0
    %1214 = vmatpush1.msra.mxu0 0.0
    %1215 = vmatprep.subr.mxu0 0.0
    %1216 = vmatpush1.msra.mxu0 0.0
    %1217 = vmatprep.subr.mxu0 0.0
    %1218 = vmatpush1.msra.mxu0 0.0
    %1219 = vmatprep.subr.mxu0 0.0
    %1220 = vmatpush1.msra.mxu0 0.0
    %1221 = vmatprep.subr.mxu0 0.0
    %1222 = vmatpush1.msra.mxu0 0.0
    %1223 = vmatprep.subr.mxu0 0.0
    %1224 = vmatpush1.msra.mxu0 0.0
    %1225 = vmatprep.mubr.f32.mxu0 0.0
    %1226 = vmatmul.mubr.f32.gmra.mrb[0].mxu0 %v1159
    %v1227 = vpop.f32.mrb[0].mxu0
    %v1228 = vadd.f32 %v1156, %v1227
    %v1229 = vpop.f32.mrb[0].mxu0
    %1230 = vdwg.mxu0
    %vm1231 = vcmask 58368
    %1232 = vst.msk [vmem:[#allocation6] sm:$0x3] %vm1231, %v1228
    // Predicated region
    $region30: #{tpu_custom_call.1} parent=1 // pred_check
      _
    $region31: #{tpu_custom_call.1} parent=1 // pred_check_branch
      %1234 = sbr.rel (0) target = $region33
    $region32: #{tpu_custom_call.1} parent=1 // pred_region
      %s1236 = ssub.s32 32, 32
      %1237 = vsyncadd [#allocation5], %s1236
      %s1239 = sshll.u32 [#allocation6], 4
      %s1240 = int_to_ptr.vmem [resolvable:$true] %s1239
      %1242 = dma.vmem_to_hbm [thread:$0]  %s1240, 32, %s6, [#allocation5]
    $region33: #{tpu_custom_call.1} parent=1 // pred_fallthru
      _
    // Predicated region
    $region34: #{tpu_custom_call.1} parent=1 // pred_check
      _
    $region35: #{tpu_custom_call.1} parent=1 // pred_check_branch
      %1244 = sbr.rel (0) target = $region37
    $region36: #{tpu_custom_call.1} parent=1 // pred_region
      %1245 = dma.done [#allocation5], 32
    $region37: #{tpu_custom_call.1} parent=1 // pred_fallthru
      _
    %1246 = vsyncpa [#allocation4], 1
    %1247 = vsyncpa [#allocation5], 1

</llo_original>
